<compile_context>
chip_gen: v6e
topology: v6e:2x2x1
jax: 0.10.0
libtpu: 0.0.40
codegen_flags: <defaults>
</compile_context>

<pallas_src>
import jax
import jax.numpy as jnp
from jax.experimental import pallas as pl
from jax.experimental.pallas import tpu as pltpu  # noqa: F401  (TPU backend assumed)

HIDDEN = 32     # hidden_size
VOCAB = 16      # output_size
MAX_LEN = 7     # max_length (number of encoder outputs)
LANES = 128     # TPU lane width used for fused weight slabs


def attn_decoder_fused_kernel(emb_ref,      # (T,H)  f32  pre-gathered embeddings
                              h0_ref,       # (1,H)  f32  initial hidden
                              enc_ref,      # (L,H)  bf16 encoder outputs
                              ew_ref,       # (H,H+L) bf16 [comb_we | attn_we]
                              comb_wa_ref,  # (H,H)  bf16 attn_combine (attn_applied half)
                              comb_b_ref,   # (1,H)  f32
                              iw_ref,       # (H,128) bf16 [W_ir|W_iz|W_in|0]
                              bi_ref,       # (1,128) f32  [b_ir|b_iz|b_in|0]
                              hw_ref,       # (H,128) bf16 [W_hr|W_hz|W_hn|attn_wh|0]
                              bh_ref,       # (1,128) f32  [b_hr|b_hz|b_hn|attn_b|0]
                              out_w_ref,    # (H,V)  bf16
                              out_b_ref,    # (1,V)  f32
                              logp_ref,     # (T,V)  f32  out
                              hout_ref,     # (T,H)  f32  out
                              aw_ref):      # (T,L)  f32  out
    T, H = emb_ref.shape
    L = enc_ref.shape[0]
    f32 = jnp.float32
    bf16 = jnp.bfloat16

    # ---- hoisted token-only work: one batched matmul, off the recurrent chain ----
    emb_bf = emb_ref[...].astype(bf16)                                     # (T,H)
    e_all = jnp.dot(emb_bf, ew_ref[...], preferred_element_type=f32)       # (T,H+L)
    e_comb = e_all[:, :H] + comb_b_ref[...]                                # (T,H)
    e_attn = e_all[:, H:H + L]                                             # (T,L)

    enc = enc_ref[...]
    comb_wa = comb_wa_ref[...]
    iw = iw_ref[...]
    hw = hw_ref[...]
    bi = bi_ref[...]
    bh = bh_ref[...]
    out_w = out_w_ref[...]
    out_b = out_b_ref[...]

    h = h0_ref[...]                                                        # (1,H) f32

    # Fully unrolled static loop: LLO scheduler sees the whole chain; all
    # slice / store indices are static.
    for t in range(T):
        # One 128-lane-wide matmul for everything that consumes h as LHS
        # (GRU hidden-side gates + attention hidden-half logits).
        gh = jnp.dot(h.astype(bf16), hw, preferred_element_type=f32) + bh  # (1,128)

        # ---- attention softmax (exact normalization, f32) ----
        attn_logits = e_attn[t:t + 1, :] + gh[:, 3 * H:3 * H + L]          # (1,L)
        ex = jnp.exp(attn_logits - jnp.max(attn_logits, axis=1, keepdims=True))
        aw = ex / jnp.sum(ex, axis=1, keepdims=True)
        aw_ref[pl.ds(t, 1), :] = aw

        # ---- attn_applied = attn_weights @ encoder_outputs ----
        attn_applied = jnp.dot(aw.astype(bf16), enc, preferred_element_type=f32)  # (1,H)

        # ---- attn_combine (embedded half precomputed) + relu ----
        x = e_comb[t:t + 1, :] + jnp.dot(attn_applied.astype(bf16), comb_wa,
                                         preferred_element_type=f32)       # (1,H)
        x = jnp.maximum(x, 0.0)

        # ---- single GRU step: one fused input-side matmul, gates sliced from lanes ----
        gi = jnp.dot(x.astype(bf16), iw, preferred_element_type=f32) + bi  # (1,128)
        pre_rz = gi[:, :2 * H] + gh[:, :2 * H]
        rz = 1.0 / (1.0 + jnp.exp(-pre_rz))                                # sigmoid, f32
        r = rz[:, :H]
        z = rz[:, H:2 * H]
        n = jnp.tanh(gi[:, 2 * H:3 * H] + r * gh[:, 2 * H:3 * H])
        h = (1.0 - z) * n + z * h                                          # (1,H)
        hout_ref[pl.ds(t, 1), :] = h

        # ---- output projection + log_softmax (off the recurrent critical path) ----
        logits = jnp.dot(h.astype(bf16), out_w, preferred_element_type=f32) + out_b  # (1,V)
        shifted = logits - jnp.max(logits, axis=1, keepdims=True)
        lse = jnp.log(jnp.sum(jnp.exp(shifted), axis=1, keepdims=True))
        logp_ref[pl.ds(t, 1), :] = shifted - lse


def attn_decoder_decode(tok_ids, hidden, encoder_outputs, params):
    """Fused T-step decode (teacher-forced token sequence).

    tok_ids: (T,) int32; hidden: (1,1,H) f32; encoder_outputs: (L,H) f32.
    Returns (log_probs (T,V), hiddens (T,H), attn_weights (T,L)).
    """
    T = int(tok_ids.shape[0])
    H, V, L = HIDDEN, VOCAB, MAX_LEN
    f32, bf16 = jnp.float32, jnp.bfloat16

    # Pre-gather embeddings in the wrapper (VOCAB is tiny); one resident (T,H) input.
    emb_g = params["emb"].astype(f32)[tok_ids]                     # (T,H)
    h0 = hidden.reshape(1, H).astype(f32)
    enc = encoder_outputs.astype(bf16)                             # (L,H)

    # Split concat weights; pack fused, lane-padded weight/bias slabs (zero kernel cost).
    attn_we, attn_wh = params["attn_w"][:H], params["attn_w"][H:]  # (H,L) each
    comb_we, comb_wa = params["comb_w"][:H], params["comb_w"][H:]  # (H,H) each

    EW = jnp.concatenate([comb_we, attn_we], axis=1).astype(bf16)  # (H, H+L)

    IW = jnp.zeros((H, LANES), f32).at[:, :3 * H].set(params["w_ih"]).astype(bf16)
    HW = (jnp.zeros((H, LANES), f32)
          .at[:, :3 * H].set(params["w_hh"])
          .at[:, 3 * H:3 * H + L].set(attn_wh)
          .astype(bf16))
    BI = jnp.zeros((1, LANES), f32).at[:, :3 * H].set(params["b_ih"])
    BH = (jnp.zeros((1, LANES), f32)
          .at[:, :3 * H].set(params["b_hh"])
          .at[:, 3 * H:3 * H + L].set(params["attn_b"]))

    # Single kernel invocation: all operands resident in VMEM (~30 KiB total),
    # one writeback DMA per output.
    logp, h_all, aw = pl.pallas_call(
        attn_decoder_fused_kernel,
        out_shape=(jax.ShapeDtypeStruct((T, V), f32),
                   jax.ShapeDtypeStruct((T, H), f32),
                   jax.ShapeDtypeStruct((T, L), f32)),
    )(emb_g, h0, enc,
      EW, comb_wa.astype(bf16), params["comb_b"].astype(f32),
      IW, BI, HW, BH,
      params["out_w"].astype(bf16), params["out_b"].astype(f32))

    return logp, h_all, aw


def attn_decoder_forward(tok, hidden, encoder_outputs, params):
    """Single-step API matching the PyTorch forward: returns ((1,V), (1,1,H), (1,L))."""
    logp, h_all, aw = attn_decoder_decode(tok.reshape(1), hidden, encoder_outputs, params)
    return logp, h_all.reshape(1, 1, HIDDEN), aw


def reference_decode(tok_ids, hidden, encoder_outputs, params):
    """Pure-JAX (f32) reference of T sequential AttnDecoderRNN.forward calls."""
    H = HIDDEN
    h = hidden.reshape(1, H)
    logps, hs, aws = [], [], []
    for t in range(tok_ids.shape[0]):
        emb = params["emb"][tok_ids[t]][None, :]
        attn_logits = jnp.concatenate([emb, h], axis=1) @ params["attn_w"] + params["attn_b"]
        aw = jax.nn.softmax(attn_logits, axis=1)
        attn_applied = aw @ encoder_outputs
        x = jnp.concatenate([emb, attn_applied], axis=1) @ params["comb_w"] + params["comb_b"]
        x = jnp.maximum(x, 0.0)
        gi = x @ params["w_ih"] + params["b_ih"]
        gh = h @ params["w_hh"] + params["b_hh"]
        r = jax.nn.sigmoid(gi[:, :H] + gh[:, :H])
        z = jax.nn.sigmoid(gi[:, H:2 * H] + gh[:, H:2 * H])
        n = jnp.tanh(gi[:, 2 * H:] + r * gh[:, 2 * H:])
        h = (1.0 - z) * n + z * h
        logp = jax.nn.log_softmax(h @ params["out_w"] + params["out_b"], axis=1)
        logps.append(logp); hs.append(h); aws.append(aw)
    return (jnp.concatenate(logps, axis=0),
            jnp.concatenate(hs, axis=0),
            jnp.concatenate(aws, axis=0))


def init_params(key):
    ks = jax.random.split(key, 11)
    s = 0.1  # small deterministic init
    f32 = jnp.float32
    return {
        "emb":    s * jax.random.normal(ks[0], (VOCAB, HIDDEN), f32),
        "attn_w": s * jax.random.normal(ks[1], (2 * HIDDEN, MAX_LEN), f32),
        "attn_b": s * jax.random.normal(ks[2], (1, MAX_LEN), f32),
        "comb_w": s * jax.random.normal(ks[3], (2 * HIDDEN, HIDDEN), f32),
        "comb_b": s * jax.random.normal(ks[4], (1, HIDDEN), f32),
        "w_ih":   s * jax.random.normal(ks[5], (HIDDEN, 3 * HIDDEN), f32),
        "b_ih":   s * jax.random.normal(ks[6], (1, 3 * HIDDEN), f32),
        "w_hh":   s * jax.random.normal(ks[7], (HIDDEN, 3 * HIDDEN), f32),
        "b_hh":   s * jax.random.normal(ks[8], (1, 3 * HIDDEN), f32),
        "out_w":  s * jax.random.normal(ks[9], (HIDDEN, VOCAB), f32),
        "out_b":  s * jax.random.normal(ks[10], (1, VOCAB), f32),
    }


if __name__ == "__main__":
    key = jax.random.PRNGKey(0)
    pkey, ekey, hkey, tkey = jax.random.split(key, 4)

    T = 5
    params = init_params(pkey)
    tok_ids = jax.random.randint(tkey, (T,), 0, VOCAB, dtype=jnp.int32)
    hidden = 0.1 * jax.random.normal(hkey, (1, 1, HIDDEN), jnp.float32)
    encoder_outputs = jax.random.normal(ekey, (MAX_LEN, HIDDEN), jnp.float32)

    # Fused multi-step decode (one pallas_call, one kernel invocation for all T steps).
    logp, h_all, aw = attn_decoder_decode(tok_ids, hidden, encoder_outputs, params)
    jax.block_until_ready((logp, h_all, aw))

    assert logp.shape == (T, VOCAB)
    assert h_all.shape == (T, HIDDEN)
    assert aw.shape == (T, MAX_LEN)
    assert bool(jnp.all(jnp.isfinite(logp)))
    assert bool(jnp.all(jnp.isfinite(h_all)))
    # Exact (non-approximate) normalization inside the kernel.
    assert bool(jnp.allclose(jnp.sum(jnp.exp(logp), axis=1), 1.0, atol=1e-3))
    assert bool(jnp.allclose(jnp.sum(aw, axis=1), 1.0, atol=1e-3))

    # Cross-check against pure-f32 sequential reference of the PyTorch forward
    # (tolerance accounts for bf16 operands at the MXU boundary).
    ref_logp, ref_h, ref_aw = reference_decode(tok_ids, hidden, encoder_outputs, params)
    assert bool(jnp.allclose(logp, ref_logp, atol=2e-2))
    assert bool(jnp.allclose(h_all, ref_h, atol=2e-2))
    assert bool(jnp.allclose(aw, ref_aw, atol=2e-2))

    # Single-step API (PyTorch forward signature).
    logp1, h1, aw1 = attn_decoder_forward(tok_ids[:1], hidden, encoder_outputs, params)
    jax.block_until_ready((logp1, h1, aw1))
    assert logp1.shape == (1, VOCAB)
    assert h1.shape == (1, 1, HIDDEN)
    assert aw1.shape == (1, MAX_LEN)
    assert bool(jnp.allclose(logp1, ref_logp[:1], atol=2e-2))

    print("KERNEL_OK")
</pallas_src>

<mosaic_0001>
module attributes {stable_mosaic.version = 11 : i64} {
  func.func @attn_decoder_fused_kernel(%arg0: memref<5x32xf32, #tpu.memory_space<vmem>>, %arg1: memref<1x32xf32, #tpu.memory_space<vmem>>, %arg2: memref<7x32xbf16, #tpu.memory_space<vmem>>, %arg3: memref<32x39xbf16, #tpu.memory_space<vmem>>, %arg4: memref<32x32xbf16, #tpu.memory_space<vmem>>, %arg5: memref<1x32xf32, #tpu.memory_space<vmem>>, %arg6: memref<32x128xbf16, #tpu.memory_space<vmem>>, %arg7: memref<1x128xf32, #tpu.memory_space<vmem>>, %arg8: memref<32x128xbf16, #tpu.memory_space<vmem>>, %arg9: memref<1x128xf32, #tpu.memory_space<vmem>>, %arg10: memref<32x16xbf16, #tpu.memory_space<vmem>>, %arg11: memref<1x16xf32, #tpu.memory_space<vmem>>, %arg12: memref<5x16xf32, #tpu.memory_space<vmem>>, %arg13: memref<5x32xf32, #tpu.memory_space<vmem>>, %arg14: memref<5x7xf32, #tpu.memory_space<vmem>>) attributes {dimension_semantics = [], scalar_prefetch = 0 : i64, scratch_operands = 0 : i64, tpu.core_type = #tpu.core_type<tc>} {
    %c0 = arith.constant 0 : index
    %c0_0 = arith.constant 0 : index
    %0 = vector.load %arg0[%c0, %c0_0] : memref<5x32xf32, #tpu.memory_space<vmem>>, vector<5x32xf32>
    %1 = arith.truncf %0 : vector<5x32xf32> to vector<5x32xbf16>
    %c0_1 = arith.constant 0 : index
    %c0_2 = arith.constant 0 : index
    %2 = vector.load %arg3[%c0_1, %c0_2] : memref<32x39xbf16, #tpu.memory_space<vmem>>, vector<32x39xbf16>
    %cst = arith.constant dense<0.000000e+00> : vector<5x39xf32>
    %3 = tpu.matmul %1, %2, %cst {dimension_numbers = #tpu.dot_dimension_numbers<[1], [0], [0], [1], [0, 0, 1, 1], [], []>} : vector<5x32xbf16>, vector<32x39xbf16>, vector<5x39xf32> -> vector<5x39xf32>
    %4 = vector.extract_strided_slice %3 {offsets = [0, 0], sizes = [5, 32], strides = [1, 1]} : vector<5x39xf32> to vector<5x32xf32>
    %c0_3 = arith.constant 0 : index
    %c0_4 = arith.constant 0 : index
    %5 = vector.load %arg5[%c0_3, %c0_4] : memref<1x32xf32, #tpu.memory_space<vmem>>, vector<1x32xf32>
    %6 = vector.broadcast %5 : vector<1x32xf32> to vector<5x32xf32>
    %7 = arith.addf %4, %6 : vector<5x32xf32>
    %8 = vector.extract_strided_slice %3 {offsets = [0, 32], sizes = [5, 7], strides = [1, 1]} : vector<5x39xf32> to vector<5x7xf32>
    %c0_5 = arith.constant 0 : index
    %c0_6 = arith.constant 0 : index
    %9 = vector.load %arg2[%c0_5, %c0_6] : memref<7x32xbf16, #tpu.memory_space<vmem>>, vector<7x32xbf16>
    %c0_7 = arith.constant 0 : index
    %c0_8 = arith.constant 0 : index
    %10 = vector.load %arg4[%c0_7, %c0_8] : memref<32x32xbf16, #tpu.memory_space<vmem>>, vector<32x32xbf16>
    %c0_9 = arith.constant 0 : index
    %c0_10 = arith.constant 0 : index
    %11 = vector.load %arg6[%c0_9, %c0_10] : memref<32x128xbf16, #tpu.memory_space<vmem>>, vector<32x128xbf16>
    %c0_11 = arith.constant 0 : index
    %c0_12 = arith.constant 0 : index
    %12 = vector.load %arg8[%c0_11, %c0_12] : memref<32x128xbf16, #tpu.memory_space<vmem>>, vector<32x128xbf16>
    %c0_13 = arith.constant 0 : index
    %c0_14 = arith.constant 0 : index
    %13 = vector.load %arg7[%c0_13, %c0_14] : memref<1x128xf32, #tpu.memory_space<vmem>>, vector<1x128xf32>
    %c0_15 = arith.constant 0 : index
    %c0_16 = arith.constant 0 : index
    %14 = vector.load %arg9[%c0_15, %c0_16] : memref<1x128xf32, #tpu.memory_space<vmem>>, vector<1x128xf32>
    %c0_17 = arith.constant 0 : index
    %c0_18 = arith.constant 0 : index
    %15 = vector.load %arg10[%c0_17, %c0_18] : memref<32x16xbf16, #tpu.memory_space<vmem>>, vector<32x16xbf16>
    %c0_19 = arith.constant 0 : index
    %c0_20 = arith.constant 0 : index
    %16 = vector.load %arg11[%c0_19, %c0_20] : memref<1x16xf32, #tpu.memory_space<vmem>>, vector<1x16xf32>
    %c0_21 = arith.constant 0 : index
    %c0_22 = arith.constant 0 : index
    %17 = vector.load %arg1[%c0_21, %c0_22] : memref<1x32xf32, #tpu.memory_space<vmem>>, vector<1x32xf32>
    %18 = arith.truncf %17 : vector<1x32xf32> to vector<1x32xbf16>
    %cst_23 = arith.constant dense<0.000000e+00> : vector<1x128xf32>
    %19 = tpu.matmul %18, %12, %cst_23 {dimension_numbers = #tpu.dot_dimension_numbers<[1], [0], [0], [1], [0, 0, 1, 1], [], []>} : vector<1x32xbf16>, vector<32x128xbf16>, vector<1x128xf32> -> vector<1x128xf32>
    %20 = arith.addf %19, %14 : vector<1x128xf32>
    %21 = vector.extract_strided_slice %8 {offsets = [0, 0], sizes = [1, 7], strides = [1, 1]} : vector<5x7xf32> to vector<1x7xf32>
    %22 = vector.extract_strided_slice %20 {offsets = [0, 96], sizes = [1, 7], strides = [1, 1]} : vector<1x128xf32> to vector<1x7xf32>
    %23 = arith.addf %21, %22 : vector<1x7xf32>
    %cst_24 = arith.constant dense<0xFF800000> : vector<1xf32>
    %24 = vector.multi_reduction <maximumf>, %23, %cst_24 [1] : vector<1x7xf32> to vector<1xf32>
    %25 = vector.shape_cast %24 : vector<1xf32> to vector<1x1xf32>
    %26 = vector.broadcast %25 : vector<1x1xf32> to vector<1x7xf32>
    %27 = arith.subf %23, %26 : vector<1x7xf32>
    %28 = math.exp %27 : vector<1x7xf32>
    %cst_25 = arith.constant dense<0.000000e+00> : vector<1xf32>
    %29 = vector.multi_reduction <add>, %28, %cst_25 [1] : vector<1x7xf32> to vector<1xf32>
    %30 = vector.shape_cast %29 : vector<1xf32> to vector<1x1xf32>
    %31 = vector.broadcast %30 : vector<1x1xf32> to vector<1x7xf32>
    %32 = arith.divf %28, %31 : vector<1x7xf32>
    %c0_26 = arith.constant 0 : index
    %c0_27 = arith.constant 0 : index
    %33 = vector.load %arg14[%c0_26, %c0_27] : memref<5x7xf32, #tpu.memory_space<vmem>>, vector<1x7xf32>
    tpu.vector_store %arg14[%c0_26, %c0_27], %32 {strides = array<i32>} : memref<5x7xf32, #tpu.memory_space<vmem>>, vector<1x7xf32>,
    %34 = arith.truncf %32 : vector<1x7xf32> to vector<1x7xbf16>
    %cst_28 = arith.constant dense<0.000000e+00> : vector<1x32xf32>
    %35 = tpu.matmul %34, %9, %cst_28 {dimension_numbers = #tpu.dot_dimension_numbers<[1], [0], [0], [1], [0, 0, 1, 1], [], []>} : vector<1x7xbf16>, vector<7x32xbf16>, vector<1x32xf32> -> vector<1x32xf32>
    %36 = vector.extract_strided_slice %7 {offsets = [0, 0], sizes = [1, 32], strides = [1, 1]} : vector<5x32xf32> to vector<1x32xf32>
    %37 = arith.truncf %35 : vector<1x32xf32> to vector<1x32xbf16>
    %cst_29 = arith.constant dense<0.000000e+00> : vector<1x32xf32>
    %38 = tpu.matmul %37, %10, %cst_29 {dimension_numbers = #tpu.dot_dimension_numbers<[1], [0], [0], [1], [0, 0, 1, 1], [], []>} : vector<1x32xbf16>, vector<32x32xbf16>, vector<1x32xf32> -> vector<1x32xf32>
    %39 = arith.addf %36, %38 : vector<1x32xf32>
    %cst_30 = arith.constant 0.000000e+00 : f32
    %40 = vector.broadcast %cst_30 : f32 to vector<1x32xf32>
    %41 = arith.maximumf %39, %40 : vector<1x32xf32>
    %42 = arith.truncf %41 : vector<1x32xf32> to vector<1x32xbf16>
    %cst_31 = arith.constant dense<0.000000e+00> : vector<1x128xf32>
    %43 = tpu.matmul %42, %11, %cst_31 {dimension_numbers = #tpu.dot_dimension_numbers<[1], [0], [0], [1], [0, 0, 1, 1], [], []>} : vector<1x32xbf16>, vector<32x128xbf16>, vector<1x128xf32> -> vector<1x128xf32>
    %44 = arith.addf %43, %13 : vector<1x128xf32>
    %45 = vector.extract_strided_slice %44 {offsets = [0, 0], sizes = [1, 64], strides = [1, 1]} : vector<1x128xf32> to vector<1x64xf32>
    %46 = vector.extract_strided_slice %20 {offsets = [0, 0], sizes = [1, 64], strides = [1, 1]} : vector<1x128xf32> to vector<1x64xf32>
    %47 = arith.addf %45, %46 : vector<1x64xf32>
    %cst_32 = arith.constant 0.000000e+00 : f32
    %48 = vector.broadcast %cst_32 : f32 to vector<1x64xf32>
    %49 = arith.subf %48, %47 : vector<1x64xf32>
    %50 = math.exp %49 : vector<1x64xf32>
    %cst_33 = arith.constant 1.000000e+00 : f32
    %51 = vector.broadcast %cst_33 : f32 to vector<1x64xf32>
    %52 = arith.addf %51, %50 : vector<1x64xf32>
    %cst_34 = arith.constant 1.000000e+00 : f32
    %53 = vector.broadcast %cst_34 : f32 to vector<1x64xf32>
    %54 = arith.divf %53, %52 : vector<1x64xf32>
    %55 = vector.extract_strided_slice %54 {offsets = [0, 0], sizes = [1, 32], strides = [1, 1]} : vector<1x64xf32> to vector<1x32xf32>
    %56 = vector.extract_strided_slice %54 {offsets = [0, 32], sizes = [1, 32], strides = [1, 1]} : vector<1x64xf32> to vector<1x32xf32>
    %57 = vector.extract_strided_slice %44 {offsets = [0, 64], sizes = [1, 32], strides = [1, 1]} : vector<1x128xf32> to vector<1x32xf32>
    %58 = vector.extract_strided_slice %20 {offsets = [0, 64], sizes = [1, 32], strides = [1, 1]} : vector<1x128xf32> to vector<1x32xf32>
    %59 = arith.mulf %55, %58 : vector<1x32xf32>
    %60 = arith.addf %57, %59 : vector<1x32xf32>
    %61 = math.tanh %60 : vector<1x32xf32>
    %cst_35 = arith.constant 1.000000e+00 : f32
    %62 = vector.broadcast %cst_35 : f32 to vector<1x32xf32>
    %63 = arith.subf %62, %56 : vector<1x32xf32>
    %64 = arith.mulf %63, %61 : vector<1x32xf32>
    %65 = arith.mulf %56, %17 : vector<1x32xf32>
    %66 = arith.addf %64, %65 : vector<1x32xf32>
    %c0_36 = arith.constant 0 : index
    %c0_37 = arith.constant 0 : index
    %67 = vector.load %arg13[%c0_36, %c0_37] : memref<5x32xf32, #tpu.memory_space<vmem>>, vector<1x32xf32>
    tpu.vector_store %arg13[%c0_36, %c0_37], %66 {strides = array<i32>} : memref<5x32xf32, #tpu.memory_space<vmem>>, vector<1x32xf32>,
    %68 = arith.truncf %66 : vector<1x32xf32> to vector<1x32xbf16>
    %cst_38 = arith.constant dense<0.000000e+00> : vector<1x16xf32>
    %69 = tpu.matmul %68, %15, %cst_38 {dimension_numbers = #tpu.dot_dimension_numbers<[1], [0], [0], [1], [0, 0, 1, 1], [], []>} : vector<1x32xbf16>, vector<32x16xbf16>, vector<1x16xf32> -> vector<1x16xf32>
    %70 = arith.addf %69, %16 : vector<1x16xf32>
    %cst_39 = arith.constant dense<0xFF800000> : vector<1xf32>
    %71 = vector.multi_reduction <maximumf>, %70, %cst_39 [1] : vector<1x16xf32> to vector<1xf32>
    %72 = vector.shape_cast %71 : vector<1xf32> to vector<1x1xf32>
    %73 = vector.broadcast %72 : vector<1x1xf32> to vector<1x16xf32>
    %74 = arith.subf %70, %73 : vector<1x16xf32>
    %75 = math.exp %74 : vector<1x16xf32>
    %cst_40 = arith.constant dense<0.000000e+00> : vector<1xf32>
    %76 = vector.multi_reduction <add>, %75, %cst_40 [1] : vector<1x16xf32> to vector<1xf32>
    %77 = vector.shape_cast %76 : vector<1xf32> to vector<1x1xf32>
    %78 = math.log %77 : vector<1x1xf32>
    %79 = vector.broadcast %78 : vector<1x1xf32> to vector<1x16xf32>
    %80 = arith.subf %74, %79 : vector<1x16xf32>
    %c0_41 = arith.constant 0 : index
    %c0_42 = arith.constant 0 : index
    %81 = vector.load %arg12[%c0_41, %c0_42] : memref<5x16xf32, #tpu.memory_space<vmem>>, vector<1x16xf32>
    tpu.vector_store %arg12[%c0_41, %c0_42], %80 {strides = array<i32>} : memref<5x16xf32, #tpu.memory_space<vmem>>, vector<1x16xf32>,
    %82 = arith.truncf %66 : vector<1x32xf32> to vector<1x32xbf16>
    %cst_43 = arith.constant dense<0.000000e+00> : vector<1x128xf32>
    %83 = tpu.matmul %82, %12, %cst_43 {dimension_numbers = #tpu.dot_dimension_numbers<[1], [0], [0], [1], [0, 0, 1, 1], [], []>} : vector<1x32xbf16>, vector<32x128xbf16>, vector<1x128xf32> -> vector<1x128xf32>
    %84 = arith.addf %83, %14 : vector<1x128xf32>
    %85 = vector.extract_strided_slice %8 {offsets = [1, 0], sizes = [1, 7], strides = [1, 1]} : vector<5x7xf32> to vector<1x7xf32>
    %86 = vector.extract_strided_slice %84 {offsets = [0, 96], sizes = [1, 7], strides = [1, 1]} : vector<1x128xf32> to vector<1x7xf32>
    %87 = arith.addf %85, %86 : vector<1x7xf32>
    %cst_44 = arith.constant dense<0xFF800000> : vector<1xf32>
    %88 = vector.multi_reduction <maximumf>, %87, %cst_44 [1] : vector<1x7xf32> to vector<1xf32>
    %89 = vector.shape_cast %88 : vector<1xf32> to vector<1x1xf32>
    %90 = vector.broadcast %89 : vector<1x1xf32> to vector<1x7xf32>
    %91 = arith.subf %87, %90 : vector<1x7xf32>
    %92 = math.exp %91 : vector<1x7xf32>
    %cst_45 = arith.constant dense<0.000000e+00> : vector<1xf32>
    %93 = vector.multi_reduction <add>, %92, %cst_45 [1] : vector<1x7xf32> to vector<1xf32>
    %94 = vector.shape_cast %93 : vector<1xf32> to vector<1x1xf32>
    %95 = vector.broadcast %94 : vector<1x1xf32> to vector<1x7xf32>
    %96 = arith.divf %92, %95 : vector<1x7xf32>
    %c1 = arith.constant 1 : index
    %c0_46 = arith.constant 0 : index
    %97 = vector.load %arg14[%c1, %c0_46] : memref<5x7xf32, #tpu.memory_space<vmem>>, vector<1x7xf32>
    tpu.vector_store %arg14[%c1, %c0_46], %96 {strides = array<i32>} : memref<5x7xf32, #tpu.memory_space<vmem>>, vector<1x7xf32>,
    %98 = arith.truncf %96 : vector<1x7xf32> to vector<1x7xbf16>
    %cst_47 = arith.constant dense<0.000000e+00> : vector<1x32xf32>
    %99 = tpu.matmul %98, %9, %cst_47 {dimension_numbers = #tpu.dot_dimension_numbers<[1], [0], [0], [1], [0, 0, 1, 1], [], []>} : vector<1x7xbf16>, vector<7x32xbf16>, vector<1x32xf32> -> vector<1x32xf32>
    %100 = vector.extract_strided_slice %7 {offsets = [1, 0], sizes = [1, 32], strides = [1, 1]} : vector<5x32xf32> to vector<1x32xf32>
    %101 = arith.truncf %99 : vector<1x32xf32> to vector<1x32xbf16>
    %cst_48 = arith.constant dense<0.000000e+00> : vector<1x32xf32>
    %102 = tpu.matmul %101, %10, %cst_48 {dimension_numbers = #tpu.dot_dimension_numbers<[1], [0], [0], [1], [0, 0, 1, 1], [], []>} : vector<1x32xbf16>, vector<32x32xbf16>, vector<1x32xf32> -> vector<1x32xf32>
    %103 = arith.addf %100, %102 : vector<1x32xf32>
    %cst_49 = arith.constant 0.000000e+00 : f32
    %104 = vector.broadcast %cst_49 : f32 to vector<1x32xf32>
    %105 = arith.maximumf %103, %104 : vector<1x32xf32>
    %106 = arith.truncf %105 : vector<1x32xf32> to vector<1x32xbf16>
    %cst_50 = arith.constant dense<0.000000e+00> : vector<1x128xf32>
    %107 = tpu.matmul %106, %11, %cst_50 {dimension_numbers = #tpu.dot_dimension_numbers<[1], [0], [0], [1], [0, 0, 1, 1], [], []>} : vector<1x32xbf16>, vector<32x128xbf16>, vector<1x128xf32> -> vector<1x128xf32>
    %108 = arith.addf %107, %13 : vector<1x128xf32>
    %109 = vector.extract_strided_slice %108 {offsets = [0, 0], sizes = [1, 64], strides = [1, 1]} : vector<1x128xf32> to vector<1x64xf32>
    %110 = vector.extract_strided_slice %84 {offsets = [0, 0], sizes = [1, 64], strides = [1, 1]} : vector<1x128xf32> to vector<1x64xf32>
    %111 = arith.addf %109, %110 : vector<1x64xf32>
    %cst_51 = arith.constant 0.000000e+00 : f32
    %112 = vector.broadcast %cst_51 : f32 to vector<1x64xf32>
    %113 = arith.subf %112, %111 : vector<1x64xf32>
    %114 = math.exp %113 : vector<1x64xf32>
    %cst_52 = arith.constant 1.000000e+00 : f32
    %115 = vector.broadcast %cst_52 : f32 to vector<1x64xf32>
    %116 = arith.addf %115, %114 : vector<1x64xf32>
    %cst_53 = arith.constant 1.000000e+00 : f32
    %117 = vector.broadcast %cst_53 : f32 to vector<1x64xf32>
    %118 = arith.divf %117, %116 : vector<1x64xf32>
    %119 = vector.extract_strided_slice %118 {offsets = [0, 0], sizes = [1, 32], strides = [1, 1]} : vector<1x64xf32> to vector<1x32xf32>
    %120 = vector.extract_strided_slice %118 {offsets = [0, 32], sizes = [1, 32], strides = [1, 1]} : vector<1x64xf32> to vector<1x32xf32>
    %121 = vector.extract_strided_slice %108 {offsets = [0, 64], sizes = [1, 32], strides = [1, 1]} : vector<1x128xf32> to vector<1x32xf32>
    %122 = vector.extract_strided_slice %84 {offsets = [0, 64], sizes = [1, 32], strides = [1, 1]} : vector<1x128xf32> to vector<1x32xf32>
    %123 = arith.mulf %119, %122 : vector<1x32xf32>
    %124 = arith.addf %121, %123 : vector<1x32xf32>
    %125 = math.tanh %124 : vector<1x32xf32>
    %cst_54 = arith.constant 1.000000e+00 : f32
    %126 = vector.broadcast %cst_54 : f32 to vector<1x32xf32>
    %127 = arith.subf %126, %120 : vector<1x32xf32>
    %128 = arith.mulf %127, %125 : vector<1x32xf32>
    %129 = arith.mulf %120, %66 : vector<1x32xf32>
    %130 = arith.addf %128, %129 : vector<1x32xf32>
    %c1_55 = arith.constant 1 : index
    %c0_56 = arith.constant 0 : index
    %131 = vector.load %arg13[%c1_55, %c0_56] : memref<5x32xf32, #tpu.memory_space<vmem>>, vector<1x32xf32>
    tpu.vector_store %arg13[%c1_55, %c0_56], %130 {strides = array<i32>} : memref<5x32xf32, #tpu.memory_space<vmem>>, vector<1x32xf32>,
    %132 = arith.truncf %130 : vector<1x32xf32> to vector<1x32xbf16>
    %cst_57 = arith.constant dense<0.000000e+00> : vector<1x16xf32>
    %133 = tpu.matmul %132, %15, %cst_57 {dimension_numbers = #tpu.dot_dimension_numbers<[1], [0], [0], [1], [0, 0, 1, 1], [], []>} : vector<1x32xbf16>, vector<32x16xbf16>, vector<1x16xf32> -> vector<1x16xf32>
    %134 = arith.addf %133, %16 : vector<1x16xf32>
    %cst_58 = arith.constant dense<0xFF800000> : vector<1xf32>
    %135 = vector.multi_reduction <maximumf>, %134, %cst_58 [1] : vector<1x16xf32> to vector<1xf32>
    %136 = vector.shape_cast %135 : vector<1xf32> to vector<1x1xf32>
    %137 = vector.broadcast %136 : vector<1x1xf32> to vector<1x16xf32>
    %138 = arith.subf %134, %137 : vector<1x16xf32>
    %139 = math.exp %138 : vector<1x16xf32>
    %cst_59 = arith.constant dense<0.000000e+00> : vector<1xf32>
    %140 = vector.multi_reduction <add>, %139, %cst_59 [1] : vector<1x16xf32> to vector<1xf32>
    %141 = vector.shape_cast %140 : vector<1xf32> to vector<1x1xf32>
    %142 = math.log %141 : vector<1x1xf32>
    %143 = vector.broadcast %142 : vector<1x1xf32> to vector<1x16xf32>
    %144 = arith.subf %138, %143 : vector<1x16xf32>
    %c1_60 = arith.constant 1 : index
    %c0_61 = arith.constant 0 : index
    %145 = vector.load %arg12[%c1_60, %c0_61] : memref<5x16xf32, #tpu.memory_space<vmem>>, vector<1x16xf32>
    tpu.vector_store %arg12[%c1_60, %c0_61], %144 {strides = array<i32>} : memref<5x16xf32, #tpu.memory_space<vmem>>, vector<1x16xf32>,
    %146 = arith.truncf %130 : vector<1x32xf32> to vector<1x32xbf16>
    %cst_62 = arith.constant dense<0.000000e+00> : vector<1x128xf32>
    %147 = tpu.matmul %146, %12, %cst_62 {dimension_numbers = #tpu.dot_dimension_numbers<[1], [0], [0], [1], [0, 0, 1, 1], [], []>} : vector<1x32xbf16>, vector<32x128xbf16>, vector<1x128xf32> -> vector<1x128xf32>
    %148 = arith.addf %147, %14 : vector<1x128xf32>
    %149 = vector.extract_strided_slice %8 {offsets = [2, 0], sizes = [1, 7], strides = [1, 1]} : vector<5x7xf32> to vector<1x7xf32>
    %150 = vector.extract_strided_slice %148 {offsets = [0, 96], sizes = [1, 7], strides = [1, 1]} : vector<1x128xf32> to vector<1x7xf32>
    %151 = arith.addf %149, %150 : vector<1x7xf32>
    %cst_63 = arith.constant dense<0xFF800000> : vector<1xf32>
    %152 = vector.multi_reduction <maximumf>, %151, %cst_63 [1] : vector<1x7xf32> to vector<1xf32>
    %153 = vector.shape_cast %152 : vector<1xf32> to vector<1x1xf32>
    %154 = vector.broadcast %153 : vector<1x1xf32> to vector<1x7xf32>
    %155 = arith.subf %151, %154 : vector<1x7xf32>
    %156 = math.exp %155 : vector<1x7xf32>
    %cst_64 = arith.constant dense<0.000000e+00> : vector<1xf32>
    %157 = vector.multi_reduction <add>, %156, %cst_64 [1] : vector<1x7xf32> to vector<1xf32>
    %158 = vector.shape_cast %157 : vector<1xf32> to vector<1x1xf32>
    %159 = vector.broadcast %158 : vector<1x1xf32> to vector<1x7xf32>
    %160 = arith.divf %156, %159 : vector<1x7xf32>
    %c2 = arith.constant 2 : index
    %c0_65 = arith.constant 0 : index
    %161 = vector.load %arg14[%c2, %c0_65] : memref<5x7xf32, #tpu.memory_space<vmem>>, vector<1x7xf32>
    tpu.vector_store %arg14[%c2, %c0_65], %160 {strides = array<i32>} : memref<5x7xf32, #tpu.memory_space<vmem>>, vector<1x7xf32>,
    %162 = arith.truncf %160 : vector<1x7xf32> to vector<1x7xbf16>
    %cst_66 = arith.constant dense<0.000000e+00> : vector<1x32xf32>
    %163 = tpu.matmul %162, %9, %cst_66 {dimension_numbers = #tpu.dot_dimension_numbers<[1], [0], [0], [1], [0, 0, 1, 1], [], []>} : vector<1x7xbf16>, vector<7x32xbf16>, vector<1x32xf32> -> vector<1x32xf32>
    %164 = vector.extract_strided_slice %7 {offsets = [2, 0], sizes = [1, 32], strides = [1, 1]} : vector<5x32xf32> to vector<1x32xf32>
    %165 = arith.truncf %163 : vector<1x32xf32> to vector<1x32xbf16>
    %cst_67 = arith.constant dense<0.000000e+00> : vector<1x32xf32>
    %166 = tpu.matmul %165, %10, %cst_67 {dimension_numbers = #tpu.dot_dimension_numbers<[1], [0], [0], [1], [0, 0, 1, 1], [], []>} : vector<1x32xbf16>, vector<32x32xbf16>, vector<1x32xf32> -> vector<1x32xf32>
    %167 = arith.addf %164, %166 : vector<1x32xf32>
    %cst_68 = arith.constant 0.000000e+00 : f32
    %168 = vector.broadcast %cst_68 : f32 to vector<1x32xf32>
    %169 = arith.maximumf %167, %168 : vector<1x32xf32>
    %170 = arith.truncf %169 : vector<1x32xf32> to vector<1x32xbf16>
    %cst_69 = arith.constant dense<0.000000e+00> : vector<1x128xf32>
    %171 = tpu.matmul %170, %11, %cst_69 {dimension_numbers = #tpu.dot_dimension_numbers<[1], [0], [0], [1], [0, 0, 1, 1], [], []>} : vector<1x32xbf16>, vector<32x128xbf16>, vector<1x128xf32> -> vector<1x128xf32>
    %172 = arith.addf %171, %13 : vector<1x128xf32>
    %173 = vector.extract_strided_slice %172 {offsets = [0, 0], sizes = [1, 64], strides = [1, 1]} : vector<1x128xf32> to vector<1x64xf32>
    %174 = vector.extract_strided_slice %148 {offsets = [0, 0], sizes = [1, 64], strides = [1, 1]} : vector<1x128xf32> to vector<1x64xf32>
    %175 = arith.addf %173, %174 : vector<1x64xf32>
    %cst_70 = arith.constant 0.000000e+00 : f32
    %176 = vector.broadcast %cst_70 : f32 to vector<1x64xf32>
    %177 = arith.subf %176, %175 : vector<1x64xf32>
    %178 = math.exp %177 : vector<1x64xf32>
    %cst_71 = arith.constant 1.000000e+00 : f32
    %179 = vector.broadcast %cst_71 : f32 to vector<1x64xf32>
    %180 = arith.addf %179, %178 : vector<1x64xf32>
    %cst_72 = arith.constant 1.000000e+00 : f32
    %181 = vector.broadcast %cst_72 : f32 to vector<1x64xf32>
    %182 = arith.divf %181, %180 : vector<1x64xf32>
    %183 = vector.extract_strided_slice %182 {offsets = [0, 0], sizes = [1, 32], strides = [1, 1]} : vector<1x64xf32> to vector<1x32xf32>
    %184 = vector.extract_strided_slice %182 {offsets = [0, 32], sizes = [1, 32], strides = [1, 1]} : vector<1x64xf32> to vector<1x32xf32>
    %185 = vector.extract_strided_slice %172 {offsets = [0, 64], sizes = [1, 32], strides = [1, 1]} : vector<1x128xf32> to vector<1x32xf32>
    %186 = vector.extract_strided_slice %148 {offsets = [0, 64], sizes = [1, 32], strides = [1, 1]} : vector<1x128xf32> to vector<1x32xf32>
    %187 = arith.mulf %183, %186 : vector<1x32xf32>
    %188 = arith.addf %185, %187 : vector<1x32xf32>
    %189 = math.tanh %188 : vector<1x32xf32>
    %cst_73 = arith.constant 1.000000e+00 : f32
    %190 = vector.broadcast %cst_73 : f32 to vector<1x32xf32>
    %191 = arith.subf %190, %184 : vector<1x32xf32>
    %192 = arith.mulf %191, %189 : vector<1x32xf32>
    %193 = arith.mulf %184, %130 : vector<1x32xf32>
    %194 = arith.addf %192, %193 : vector<1x32xf32>
    %c2_74 = arith.constant 2 : index
    %c0_75 = arith.constant 0 : index
    %195 = vector.load %arg13[%c2_74, %c0_75] : memref<5x32xf32, #tpu.memory_space<vmem>>, vector<1x32xf32>
    tpu.vector_store %arg13[%c2_74, %c0_75], %194 {strides = array<i32>} : memref<5x32xf32, #tpu.memory_space<vmem>>, vector<1x32xf32>,
    %196 = arith.truncf %194 : vector<1x32xf32> to vector<1x32xbf16>
    %cst_76 = arith.constant dense<0.000000e+00> : vector<1x16xf32>
    %197 = tpu.matmul %196, %15, %cst_76 {dimension_numbers = #tpu.dot_dimension_numbers<[1], [0], [0], [1], [0, 0, 1, 1], [], []>} : vector<1x32xbf16>, vector<32x16xbf16>, vector<1x16xf32> -> vector<1x16xf32>
    %198 = arith.addf %197, %16 : vector<1x16xf32>
    %cst_77 = arith.constant dense<0xFF800000> : vector<1xf32>
    %199 = vector.multi_reduction <maximumf>, %198, %cst_77 [1] : vector<1x16xf32> to vector<1xf32>
    %200 = vector.shape_cast %199 : vector<1xf32> to vector<1x1xf32>
    %201 = vector.broadcast %200 : vector<1x1xf32> to vector<1x16xf32>
    %202 = arith.subf %198, %201 : vector<1x16xf32>
    %203 = math.exp %202 : vector<1x16xf32>
    %cst_78 = arith.constant dense<0.000000e+00> : vector<1xf32>
    %204 = vector.multi_reduction <add>, %203, %cst_78 [1] : vector<1x16xf32> to vector<1xf32>
    %205 = vector.shape_cast %204 : vector<1xf32> to vector<1x1xf32>
    %206 = math.log %205 : vector<1x1xf32>
    %207 = vector.broadcast %206 : vector<1x1xf32> to vector<1x16xf32>
    %208 = arith.subf %202, %207 : vector<1x16xf32>
    %c2_79 = arith.constant 2 : index
    %c0_80 = arith.constant 0 : index
    %209 = vector.load %arg12[%c2_79, %c0_80] : memref<5x16xf32, #tpu.memory_space<vmem>>, vector<1x16xf32>
    tpu.vector_store %arg12[%c2_79, %c0_80], %208 {strides = array<i32>} : memref<5x16xf32, #tpu.memory_space<vmem>>, vector<1x16xf32>,
    %210 = arith.truncf %194 : vector<1x32xf32> to vector<1x32xbf16>
    %cst_81 = arith.constant dense<0.000000e+00> : vector<1x128xf32>
    %211 = tpu.matmul %210, %12, %cst_81 {dimension_numbers = #tpu.dot_dimension_numbers<[1], [0], [0], [1], [0, 0, 1, 1], [], []>} : vector<1x32xbf16>, vector<32x128xbf16>, vector<1x128xf32> -> vector<1x128xf32>
    %212 = arith.addf %211, %14 : vector<1x128xf32>
    %213 = vector.extract_strided_slice %8 {offsets = [3, 0], sizes = [1, 7], strides = [1, 1]} : vector<5x7xf32> to vector<1x7xf32>
    %214 = vector.extract_strided_slice %212 {offsets = [0, 96], sizes = [1, 7], strides = [1, 1]} : vector<1x128xf32> to vector<1x7xf32>
    %215 = arith.addf %213, %214 : vector<1x7xf32>
    %cst_82 = arith.constant dense<0xFF800000> : vector<1xf32>
    %216 = vector.multi_reduction <maximumf>, %215, %cst_82 [1] : vector<1x7xf32> to vector<1xf32>
    %217 = vector.shape_cast %216 : vector<1xf32> to vector<1x1xf32>
    %218 = vector.broadcast %217 : vector<1x1xf32> to vector<1x7xf32>
    %219 = arith.subf %215, %218 : vector<1x7xf32>
    %220 = math.exp %219 : vector<1x7xf32>
    %cst_83 = arith.constant dense<0.000000e+00> : vector<1xf32>
    %221 = vector.multi_reduction <add>, %220, %cst_83 [1] : vector<1x7xf32> to vector<1xf32>
    %222 = vector.shape_cast %221 : vector<1xf32> to vector<1x1xf32>
    %223 = vector.broadcast %222 : vector<1x1xf32> to vector<1x7xf32>
    %224 = arith.divf %220, %223 : vector<1x7xf32>
    %c3 = arith.constant 3 : index
    %c0_84 = arith.constant 0 : index
    %225 = vector.load %arg14[%c3, %c0_84] : memref<5x7xf32, #tpu.memory_space<vmem>>, vector<1x7xf32>
    tpu.vector_store %arg14[%c3, %c0_84], %224 {strides = array<i32>} : memref<5x7xf32, #tpu.memory_space<vmem>>, vector<1x7xf32>,
    %226 = arith.truncf %224 : vector<1x7xf32> to vector<1x7xbf16>
    %cst_85 = arith.constant dense<0.000000e+00> : vector<1x32xf32>
    %227 = tpu.matmul %226, %9, %cst_85 {dimension_numbers = #tpu.dot_dimension_numbers<[1], [0], [0], [1], [0, 0, 1, 1], [], []>} : vector<1x7xbf16>, vector<7x32xbf16>, vector<1x32xf32> -> vector<1x32xf32>
    %228 = vector.extract_strided_slice %7 {offsets = [3, 0], sizes = [1, 32], strides = [1, 1]} : vector<5x32xf32> to vector<1x32xf32>
    %229 = arith.truncf %227 : vector<1x32xf32> to vector<1x32xbf16>
    %cst_86 = arith.constant dense<0.000000e+00> : vector<1x32xf32>
    %230 = tpu.matmul %229, %10, %cst_86 {dimension_numbers = #tpu.dot_dimension_numbers<[1], [0], [0], [1], [0, 0, 1, 1], [], []>} : vector<1x32xbf16>, vector<32x32xbf16>, vector<1x32xf32> -> vector<1x32xf32>
    %231 = arith.addf %228, %230 : vector<1x32xf32>
    %cst_87 = arith.constant 0.000000e+00 : f32
    %232 = vector.broadcast %cst_87 : f32 to vector<1x32xf32>
    %233 = arith.maximumf %231, %232 : vector<1x32xf32>
    %234 = arith.truncf %233 : vector<1x32xf32> to vector<1x32xbf16>
    %cst_88 = arith.constant dense<0.000000e+00> : vector<1x128xf32>
    %235 = tpu.matmul %234, %11, %cst_88 {dimension_numbers = #tpu.dot_dimension_numbers<[1], [0], [0], [1], [0, 0, 1, 1], [], []>} : vector<1x32xbf16>, vector<32x128xbf16>, vector<1x128xf32> -> vector<1x128xf32>
    %236 = arith.addf %235, %13 : vector<1x128xf32>
    %237 = vector.extract_strided_slice %236 {offsets = [0, 0], sizes = [1, 64], strides = [1, 1]} : vector<1x128xf32> to vector<1x64xf32>
    %238 = vector.extract_strided_slice %212 {offsets = [0, 0], sizes = [1, 64], strides = [1, 1]} : vector<1x128xf32> to vector<1x64xf32>
    %239 = arith.addf %237, %238 : vector<1x64xf32>
    %cst_89 = arith.constant 0.000000e+00 : f32
    %240 = vector.broadcast %cst_89 : f32 to vector<1x64xf32>
    %241 = arith.subf %240, %239 : vector<1x64xf32>
    %242 = math.exp %241 : vector<1x64xf32>
    %cst_90 = arith.constant 1.000000e+00 : f32
    %243 = vector.broadcast %cst_90 : f32 to vector<1x64xf32>
    %244 = arith.addf %243, %242 : vector<1x64xf32>
    %cst_91 = arith.constant 1.000000e+00 : f32
    %245 = vector.broadcast %cst_91 : f32 to vector<1x64xf32>
    %246 = arith.divf %245, %244 : vector<1x64xf32>
    %247 = vector.extract_strided_slice %246 {offsets = [0, 0], sizes = [1, 32], strides = [1, 1]} : vector<1x64xf32> to vector<1x32xf32>
    %248 = vector.extract_strided_slice %246 {offsets = [0, 32], sizes = [1, 32], strides = [1, 1]} : vector<1x64xf32> to vector<1x32xf32>
    %249 = vector.extract_strided_slice %236 {offsets = [0, 64], sizes = [1, 32], strides = [1, 1]} : vector<1x128xf32> to vector<1x32xf32>
    %250 = vector.extract_strided_slice %212 {offsets = [0, 64], sizes = [1, 32], strides = [1, 1]} : vector<1x128xf32> to vector<1x32xf32>
    %251 = arith.mulf %247, %250 : vector<1x32xf32>
    %252 = arith.addf %249, %251 : vector<1x32xf32>
    %253 = math.tanh %252 : vector<1x32xf32>
    %cst_92 = arith.constant 1.000000e+00 : f32
    %254 = vector.broadcast %cst_92 : f32 to vector<1x32xf32>
    %255 = arith.subf %254, %248 : vector<1x32xf32>
    %256 = arith.mulf %255, %253 : vector<1x32xf32>
    %257 = arith.mulf %248, %194 : vector<1x32xf32>
    %258 = arith.addf %256, %257 : vector<1x32xf32>
    %c3_93 = arith.constant 3 : index
    %c0_94 = arith.constant 0 : index
    %259 = vector.load %arg13[%c3_93, %c0_94] : memref<5x32xf32, #tpu.memory_space<vmem>>, vector<1x32xf32>
    tpu.vector_store %arg13[%c3_93, %c0_94], %258 {strides = array<i32>} : memref<5x32xf32, #tpu.memory_space<vmem>>, vector<1x32xf32>,
    %260 = arith.truncf %258 : vector<1x32xf32> to vector<1x32xbf16>
    %cst_95 = arith.constant dense<0.000000e+00> : vector<1x16xf32>
    %261 = tpu.matmul %260, %15, %cst_95 {dimension_numbers = #tpu.dot_dimension_numbers<[1], [0], [0], [1], [0, 0, 1, 1], [], []>} : vector<1x32xbf16>, vector<32x16xbf16>, vector<1x16xf32> -> vector<1x16xf32>
    %262 = arith.addf %261, %16 : vector<1x16xf32>
    %cst_96 = arith.constant dense<0xFF800000> : vector<1xf32>
    %263 = vector.multi_reduction <maximumf>, %262, %cst_96 [1] : vector<1x16xf32> to vector<1xf32>
    %264 = vector.shape_cast %263 : vector<1xf32> to vector<1x1xf32>
    %265 = vector.broadcast %264 : vector<1x1xf32> to vector<1x16xf32>
    %266 = arith.subf %262, %265 : vector<1x16xf32>
    %267 = math.exp %266 : vector<1x16xf32>
    %cst_97 = arith.constant dense<0.000000e+00> : vector<1xf32>
    %268 = vector.multi_reduction <add>, %267, %cst_97 [1] : vector<1x16xf32> to vector<1xf32>
    %269 = vector.shape_cast %268 : vector<1xf32> to vector<1x1xf32>
    %270 = math.log %269 : vector<1x1xf32>
    %271 = vector.broadcast %270 : vector<1x1xf32> to vector<1x16xf32>
    %272 = arith.subf %266, %271 : vector<1x16xf32>
    %c3_98 = arith.constant 3 : index
    %c0_99 = arith.constant 0 : index
    %273 = vector.load %arg12[%c3_98, %c0_99] : memref<5x16xf32, #tpu.memory_space<vmem>>, vector<1x16xf32>
    tpu.vector_store %arg12[%c3_98, %c0_99], %272 {strides = array<i32>} : memref<5x16xf32, #tpu.memory_space<vmem>>, vector<1x16xf32>,
    %274 = arith.truncf %258 : vector<1x32xf32> to vector<1x32xbf16>
    %cst_100 = arith.constant dense<0.000000e+00> : vector<1x128xf32>
    %275 = tpu.matmul %274, %12, %cst_100 {dimension_numbers = #tpu.dot_dimension_numbers<[1], [0], [0], [1], [0, 0, 1, 1], [], []>} : vector<1x32xbf16>, vector<32x128xbf16>, vector<1x128xf32> -> vector<1x128xf32>
    %276 = arith.addf %275, %14 : vector<1x128xf32>
    %277 = vector.extract_strided_slice %8 {offsets = [4, 0], sizes = [1, 7], strides = [1, 1]} : vector<5x7xf32> to vector<1x7xf32>
    %278 = vector.extract_strided_slice %276 {offsets = [0, 96], sizes = [1, 7], strides = [1, 1]} : vector<1x128xf32> to vector<1x7xf32>
    %279 = arith.addf %277, %278 : vector<1x7xf32>
    %cst_101 = arith.constant dense<0xFF800000> : vector<1xf32>
    %280 = vector.multi_reduction <maximumf>, %279, %cst_101 [1] : vector<1x7xf32> to vector<1xf32>
    %281 = vector.shape_cast %280 : vector<1xf32> to vector<1x1xf32>
    %282 = vector.broadcast %281 : vector<1x1xf32> to vector<1x7xf32>
    %283 = arith.subf %279, %282 : vector<1x7xf32>
    %284 = math.exp %283 : vector<1x7xf32>
    %cst_102 = arith.constant dense<0.000000e+00> : vector<1xf32>
    %285 = vector.multi_reduction <add>, %284, %cst_102 [1] : vector<1x7xf32> to vector<1xf32>
    %286 = vector.shape_cast %285 : vector<1xf32> to vector<1x1xf32>
    %287 = vector.broadcast %286 : vector<1x1xf32> to vector<1x7xf32>
    %288 = arith.divf %284, %287 : vector<1x7xf32>
    %c4 = arith.constant 4 : index
    %c0_103 = arith.constant 0 : index
    %289 = vector.load %arg14[%c4, %c0_103] : memref<5x7xf32, #tpu.memory_space<vmem>>, vector<1x7xf32>
    tpu.vector_store %arg14[%c4, %c0_103], %288 {strides = array<i32>} : memref<5x7xf32, #tpu.memory_space<vmem>>, vector<1x7xf32>,
    %290 = arith.truncf %288 : vector<1x7xf32> to vector<1x7xbf16>
    %cst_104 = arith.constant dense<0.000000e+00> : vector<1x32xf32>
    %291 = tpu.matmul %290, %9, %cst_104 {dimension_numbers = #tpu.dot_dimension_numbers<[1], [0], [0], [1], [0, 0, 1, 1], [], []>} : vector<1x7xbf16>, vector<7x32xbf16>, vector<1x32xf32> -> vector<1x32xf32>
    %292 = vector.extract_strided_slice %7 {offsets = [4, 0], sizes = [1, 32], strides = [1, 1]} : vector<5x32xf32> to vector<1x32xf32>
    %293 = arith.truncf %291 : vector<1x32xf32> to vector<1x32xbf16>
    %cst_105 = arith.constant dense<0.000000e+00> : vector<1x32xf32>
    %294 = tpu.matmul %293, %10, %cst_105 {dimension_numbers = #tpu.dot_dimension_numbers<[1], [0], [0], [1], [0, 0, 1, 1], [], []>} : vector<1x32xbf16>, vector<32x32xbf16>, vector<1x32xf32> -> vector<1x32xf32>
    %295 = arith.addf %292, %294 : vector<1x32xf32>
    %cst_106 = arith.constant 0.000000e+00 : f32
    %296 = vector.broadcast %cst_106 : f32 to vector<1x32xf32>
    %297 = arith.maximumf %295, %296 : vector<1x32xf32>
    %298 = arith.truncf %297 : vector<1x32xf32> to vector<1x32xbf16>
    %cst_107 = arith.constant dense<0.000000e+00> : vector<1x128xf32>
    %299 = tpu.matmul %298, %11, %cst_107 {dimension_numbers = #tpu.dot_dimension_numbers<[1], [0], [0], [1], [0, 0, 1, 1], [], []>} : vector<1x32xbf16>, vector<32x128xbf16>, vector<1x128xf32> -> vector<1x128xf32>
    %300 = arith.addf %299, %13 : vector<1x128xf32>
    %301 = vector.extract_strided_slice %300 {offsets = [0, 0], sizes = [1, 64], strides = [1, 1]} : vector<1x128xf32> to vector<1x64xf32>
    %302 = vector.extract_strided_slice %276 {offsets = [0, 0], sizes = [1, 64], strides = [1, 1]} : vector<1x128xf32> to vector<1x64xf32>
    %303 = arith.addf %301, %302 : vector<1x64xf32>
    %cst_108 = arith.constant 0.000000e+00 : f32
    %304 = vector.broadcast %cst_108 : f32 to vector<1x64xf32>
    %305 = arith.subf %304, %303 : vector<1x64xf32>
    %306 = math.exp %305 : vector<1x64xf32>
    %cst_109 = arith.constant 1.000000e+00 : f32
    %307 = vector.broadcast %cst_109 : f32 to vector<1x64xf32>
    %308 = arith.addf %307, %306 : vector<1x64xf32>
    %cst_110 = arith.constant 1.000000e+00 : f32
    %309 = vector.broadcast %cst_110 : f32 to vector<1x64xf32>
    %310 = arith.divf %309, %308 : vector<1x64xf32>
    %311 = vector.extract_strided_slice %310 {offsets = [0, 0], sizes = [1, 32], strides = [1, 1]} : vector<1x64xf32> to vector<1x32xf32>
    %312 = vector.extract_strided_slice %310 {offsets = [0, 32], sizes = [1, 32], strides = [1, 1]} : vector<1x64xf32> to vector<1x32xf32>
    %313 = vector.extract_strided_slice %300 {offsets = [0, 64], sizes = [1, 32], strides = [1, 1]} : vector<1x128xf32> to vector<1x32xf32>
    %314 = vector.extract_strided_slice %276 {offsets = [0, 64], sizes = [1, 32], strides = [1, 1]} : vector<1x128xf32> to vector<1x32xf32>
    %315 = arith.mulf %311, %314 : vector<1x32xf32>
    %316 = arith.addf %313, %315 : vector<1x32xf32>
    %317 = math.tanh %316 : vector<1x32xf32>
    %cst_111 = arith.constant 1.000000e+00 : f32
    %318 = vector.broadcast %cst_111 : f32 to vector<1x32xf32>
    %319 = arith.subf %318, %312 : vector<1x32xf32>
    %320 = arith.mulf %319, %317 : vector<1x32xf32>
    %321 = arith.mulf %312, %258 : vector<1x32xf32>
    %322 = arith.addf %320, %321 : vector<1x32xf32>
    %c4_112 = arith.constant 4 : index
    %c0_113 = arith.constant 0 : index
    %323 = vector.load %arg13[%c4_112, %c0_113] : memref<5x32xf32, #tpu.memory_space<vmem>>, vector<1x32xf32>
    tpu.vector_store %arg13[%c4_112, %c0_113], %322 {strides = array<i32>} : memref<5x32xf32, #tpu.memory_space<vmem>>, vector<1x32xf32>,
    %324 = arith.truncf %322 : vector<1x32xf32> to vector<1x32xbf16>
    %cst_114 = arith.constant dense<0.000000e+00> : vector<1x16xf32>
    %325 = tpu.matmul %324, %15, %cst_114 {dimension_numbers = #tpu.dot_dimension_numbers<[1], [0], [0], [1], [0, 0, 1, 1], [], []>} : vector<1x32xbf16>, vector<32x16xbf16>, vector<1x16xf32> -> vector<1x16xf32>
    %326 = arith.addf %325, %16 : vector<1x16xf32>
    %cst_115 = arith.constant dense<0xFF800000> : vector<1xf32>
    %327 = vector.multi_reduction <maximumf>, %326, %cst_115 [1] : vector<1x16xf32> to vector<1xf32>
    %328 = vector.shape_cast %327 : vector<1xf32> to vector<1x1xf32>
    %329 = vector.broadcast %328 : vector<1x1xf32> to vector<1x16xf32>
    %330 = arith.subf %326, %329 : vector<1x16xf32>
    %331 = math.exp %330 : vector<1x16xf32>
    %cst_116 = arith.constant dense<0.000000e+00> : vector<1xf32>
    %332 = vector.multi_reduction <add>, %331, %cst_116 [1] : vector<1x16xf32> to vector<1xf32>
    %333 = vector.shape_cast %332 : vector<1xf32> to vector<1x1xf32>
    %334 = math.log %333 : vector<1x1xf32>
    %335 = vector.broadcast %334 : vector<1x1xf32> to vector<1x16xf32>
    %336 = arith.subf %330, %335 : vector<1x16xf32>
    %c4_117 = arith.constant 4 : index
    %c0_118 = arith.constant 0 : index
    %337 = vector.load %arg12[%c4_117, %c0_118] : memref<5x16xf32, #tpu.memory_space<vmem>>, vector<1x16xf32>
    tpu.vector_store %arg12[%c4_117, %c0_118], %336 {strides = array<i32>} : memref<5x16xf32, #tpu.memory_space<vmem>>, vector<1x16xf32>,
    return
  }
}

</mosaic_0001>

<llo_original>
// kernel: tpu_custom_call.1
$region0: #{tpu_custom_call.1}
  #allocation0 [shape = 'u32[]', space=smem, size = 0x4, offset = 0x4, fixed_abs, tag = 'smem constant byte address 0x4 - core index']
  #allocation1 [shape = 'u32[144,128]{1,0:T(1,128)}', space=vmem, size = 0x12000, scoped, tag = 'internal scratch']
  %s0 = inlined_call_operand.hbm [shape: f32[5,32], index: 0, kind: input, shape index: {}]
  %s1 = inlined_call_operand.hbm [shape: f32[1,32], index: 1, kind: input, shape index: {}]
  %s2 = inlined_call_operand.hbm [shape: bf16[7,32], index: 2, kind: input, shape index: {}]
  %s3 = inlined_call_operand.vmem [shape: bf16[32,39], index: 3, kind: input, shape index: {}]
  %s4 = inlined_call_operand.hbm [shape: bf16[32,32], index: 4, kind: input, shape index: {}]
  %s5 = inlined_call_operand.hbm [shape: f32[1,32], index: 5, kind: input, shape index: {}]
  %s6 = inlined_call_operand.vmem [shape: bf16[32,128], index: 6, kind: input, shape index: {}]
  %s7 = inlined_call_operand.hbm [shape: f32[1,128], index: 7, kind: input, shape index: {}]
  %s8 = inlined_call_operand.hbm [shape: bf16[32,128], index: 8, kind: input, shape index: {}]
  %s9 = inlined_call_operand.hbm [shape: f32[1,128], index: 9, kind: input, shape index: {}]
  %s10 = inlined_call_operand.vmem [shape: bf16[32,16], index: 10, kind: input, shape index: {}]
  %s11 = inlined_call_operand.vmem [shape: f32[1,16], index: 11, kind: input, shape index: {}]
  %s12 = inlined_call_operand.hbm [shape: f32[5,16], index: 12, kind: output, shape index: {0}]
  %s13 = inlined_call_operand.hbm [shape: f32[5,32], index: 13, kind: output, shape index: {1}]
  %s14 = inlined_call_operand.hbm [shape: f32[5,7], index: 14, kind: output, shape index: {2}]
  %15 = xla_tuple %s12, %s13, %s14
  %s16 = sld [smem:[#allocation0]]
  $region106: #{tpu_custom_call.1} parent=0
    _
  %s18 = ssub.s32 1, %s16
  %s19 = scalar_select 0, %s18, %s16
  $region1: #{tpu_custom_call.1} parent=0
    #allocation2 [shape = 'u8[4096]{0}', space=vmem, size = 0x1000, scoped, tag = 'input window, operand 0, single buffered']
    #allocation3 [shape = 's32[1]{0}', space=sflag, size = 0x4, scoped, tag = 'scoped memory for tpu_custom_call.1']
    #allocation4 [shape = 's32[1]{0}', space=sflag, size = 0x4, scoped, tag = 'scoped memory for tpu_custom_call.1']
    #allocation5 [shape = 'u8[512]{0}', space=vmem, size = 0x400, scoped, tag = 'input window, operand 1, single buffered']
    #allocation6 [shape = 's32[1]{0}', space=sflag, size = 0x4, scoped, tag = 'scoped memory for tpu_custom_call.1']
    #allocation7 [shape = 'u8[2048]{0}', space=vmem, size = 0x800, scoped, tag = 'input window, operand 2, single buffered']
    #allocation8 [shape = 'u8[8192]{0}', space=vmem, size = 0x2000, scoped, tag = 'input window, operand 4, single buffered']
    #allocation9 [shape = 's32[1]{0}', space=sflag, size = 0x4, scoped, tag = 'scoped memory for tpu_custom_call.1']
    #allocation10 [shape = 'u8[512]{0}', space=vmem, size = 0x400, scoped, tag = 'input window, operand 5, single buffered']
    #allocation11 [shape = 'u8[512]{0}', space=vmem, size = 0x400, scoped, tag = 'input window, operand 7, single buffered']
    #allocation12 [shape = 's32[1]{0}', space=sflag, size = 0x4, scoped, tag = 'scoped memory for tpu_custom_call.1']
    #allocation13 [shape = 'u8[8192]{0}', space=vmem, size = 0x2000, scoped, tag = 'input window, operand 8, single buffered']
    #allocation14 [shape = 'u8[512]{0}', space=vmem, size = 0x400, scoped, tag = 'input window, operand 9, single buffered']
    #allocation15 [shape = 's32[1]{0}', space=sflag, size = 0x4, scoped, tag = 'scoped memory for tpu_custom_call.1']
    #allocation16 [shape = 'u8[4096]{0}', space=vmem, size = 0x1000, scoped, tag = 'output window, operand 0, single buffered']
    #allocation17 [shape = 'u8[4096]{0}', space=vmem, size = 0x1000, scoped, tag = 'output window, operand 1, single buffered']
    #allocation18 [shape = 's32[1]{0}', space=sflag, size = 0x4, scoped, tag = 'scoped memory for tpu_custom_call.1']
    #allocation19 [shape = 'u8[4096]{0}', space=vmem, size = 0x1000, scoped, tag = 'output window, operand 2, single buffered']
    %20 = vsyncpa [#allocation3], 0
    %21 = vsyncpa [#allocation6], 0
    %22 = vsyncpa [#allocation9], 0
    %23 = vsyncpa [#allocation12], 0
    %24 = vsyncpa [#allocation15], 0
    %25 = vsyncpa [#allocation4], 0
    %26 = vsyncpa [#allocation18], 0
    // Predicated region
    $region2: #{tpu_custom_call.1} parent=1 // pred_check
      _
    $region3: #{tpu_custom_call.1} parent=1 // pred_check_branch
      %28 = sbr.rel (0) target = $region5
    $region4: #{tpu_custom_call.1} parent=1 // pred_region
      %s30 = ssub.s32 128, 128
      %31 = vsyncadd [#allocation3], %s30
      %s33 = sshll.u32 [#allocation2], 4
      %s34 = int_to_ptr.vmem [resolvable:$true] %s33
      %36 = dma.hbm_to_vmem [thread:$0]  %s0, 128, %s34, [#allocation3]
    $region5: #{tpu_custom_call.1} parent=1 // pred_fallthru
      _
    // Predicated region
    $region6: #{tpu_custom_call.1} parent=1 // pred_check
      _
    $region7: #{tpu_custom_call.1} parent=1 // pred_check_branch
      %38 = sbr.rel (0) target = $region9
    $region8: #{tpu_custom_call.1} parent=1 // pred_region
      %s40 = ssub.s32 16, 16
      %41 = vsyncadd [#allocation6], %s40
      %s43 = sshll.u32 [#allocation5], 4
      %s44 = int_to_ptr.vmem [resolvable:$true] %s43
      %46 = dma.hbm_to_vmem [thread:$0]  %s1, 16, %s44, [#allocation6]
    $region9: #{tpu_custom_call.1} parent=1 // pred_fallthru
      _
    // Predicated region
    $region10: #{tpu_custom_call.1} parent=1 // pred_check
      _
    $region11: #{tpu_custom_call.1} parent=1 // pred_check_branch
      %48 = sbr.rel (0) target = $region13
    $region12: #{tpu_custom_call.1} parent=1 // pred_region
      %s50 = ssub.s32 64, 64
      %51 = vsyncadd [#allocation6], %s50
      %s53 = sshll.u32 [#allocation7], 4
      %s54 = int_to_ptr.vmem [resolvable:$true] %s53
      %56 = dma.hbm_to_vmem [thread:$0]  %s2, 64, %s54, [#allocation6]
    $region13: #{tpu_custom_call.1} parent=1 // pred_fallthru
      _
    // Predicated region
    $region14: #{tpu_custom_call.1} parent=1 // pred_check
      _
    $region15: #{tpu_custom_call.1} parent=1 // pred_check_branch
      %58 = sbr.rel (0) target = $region17
    $region16: #{tpu_custom_call.1} parent=1 // pred_region
      _
    $region17: #{tpu_custom_call.1} parent=1 // pred_fallthru
      _
    // Predicated region
    $region18: #{tpu_custom_call.1} parent=1 // pred_check
      _
    $region19: #{tpu_custom_call.1} parent=1 // pred_check_branch
      %60 = sbr.rel (0) target = $region21
    $region20: #{tpu_custom_call.1} parent=1 // pred_region
      %s62 = ssub.s32 256, 256
      %63 = vsyncadd [#allocation9], %s62
      %s64 = sshll.u32 [#allocation8], 4
      %s65 = int_to_ptr.vmem [resolvable:$true] %s64
      %70 = dma.hbm_to_vmem [thread:$0]  %s4, 256, %s65, [#allocation9], 64, 64, 4
    $region21: #{tpu_custom_call.1} parent=1 // pred_fallthru
      _
    // Predicated region
    $region22: #{tpu_custom_call.1} parent=1 // pred_check
      _
    $region23: #{tpu_custom_call.1} parent=1 // pred_check_branch
      %72 = sbr.rel (0) target = $region25
    $region24: #{tpu_custom_call.1} parent=1 // pred_region
      %s74 = ssub.s32 16, 16
      %75 = vsyncadd [#allocation9], %s74
      %s77 = sshll.u32 [#allocation10], 4
      %s78 = int_to_ptr.vmem [resolvable:$true] %s77
      %80 = dma.hbm_to_vmem [thread:$0]  %s5, 16, %s78, [#allocation9]
    $region25: #{tpu_custom_call.1} parent=1 // pred_fallthru
      _
    // Predicated region
    $region26: #{tpu_custom_call.1} parent=1 // pred_check
      _
    $region27: #{tpu_custom_call.1} parent=1 // pred_check_branch
      %82 = sbr.rel (0) target = $region29
    $region28: #{tpu_custom_call.1} parent=1 // pred_region
      _
    $region29: #{tpu_custom_call.1} parent=1 // pred_fallthru
      _
    // Predicated region
    $region30: #{tpu_custom_call.1} parent=1 // pred_check
      _
    $region31: #{tpu_custom_call.1} parent=1 // pred_check_branch
      %84 = sbr.rel (0) target = $region33
    $region32: #{tpu_custom_call.1} parent=1 // pred_region
      %s86 = ssub.s32 16, 16
      %87 = vsyncadd [#allocation12], %s86
      %s89 = sshll.u32 [#allocation11], 4
      %s90 = int_to_ptr.vmem [resolvable:$true] %s89
      %92 = dma.hbm_to_vmem [thread:$0]  %s7, 16, %s90, [#allocation12]
    $region33: #{tpu_custom_call.1} parent=1 // pred_fallthru
      _
    // Predicated region
    $region34: #{tpu_custom_call.1} parent=1 // pred_check
      _
    $region35: #{tpu_custom_call.1} parent=1 // pred_check_branch
      %94 = sbr.rel (0) target = $region37
    $region36: #{tpu_custom_call.1} parent=1 // pred_region
      %s96 = ssub.s32 256, 256
      %97 = vsyncadd [#allocation12], %s96
      %s98 = sshll.u32 [#allocation13], 4
      %s99 = int_to_ptr.vmem [resolvable:$true] %s98
      %104 = dma.hbm_to_vmem [thread:$0]  %s8, 256, %s99, [#allocation12], 64, 64, 4
    $region37: #{tpu_custom_call.1} parent=1 // pred_fallthru
      _
    // Predicated region
    $region38: #{tpu_custom_call.1} parent=1 // pred_check
      _
    $region39: #{tpu_custom_call.1} parent=1 // pred_check_branch
      %106 = sbr.rel (0) target = $region41
    $region40: #{tpu_custom_call.1} parent=1 // pred_region
      %s108 = ssub.s32 16, 16
      %109 = vsyncadd [#allocation15], %s108
      %s111 = sshll.u32 [#allocation14], 4
      %s112 = int_to_ptr.vmem [resolvable:$true] %s111
      %114 = dma.hbm_to_vmem [thread:$0]  %s9, 16, %s112, [#allocation15]
    $region41: #{tpu_custom_call.1} parent=1 // pred_fallthru
      _
    // Predicated region
    $region42: #{tpu_custom_call.1} parent=1 // pred_check
      _
    $region43: #{tpu_custom_call.1} parent=1 // pred_check_branch
      %116 = sbr.rel (0) target = $region45
    $region44: #{tpu_custom_call.1} parent=1 // pred_region
      _
    $region45: #{tpu_custom_call.1} parent=1 // pred_fallthru
      _
    // Predicated region
    $region46: #{tpu_custom_call.1} parent=1 // pred_check
      _
    $region47: #{tpu_custom_call.1} parent=1 // pred_check_branch
      %118 = sbr.rel (0) target = $region49
    $region48: #{tpu_custom_call.1} parent=1 // pred_region
      _
    $region49: #{tpu_custom_call.1} parent=1 // pred_fallthru
      _
    // Predicated region
    $region50: #{tpu_custom_call.1} parent=1 // pred_check
      _
    $region51: #{tpu_custom_call.1} parent=1 // pred_check_branch
      %120 = sbr.rel (0) target = $region53
    $region52: #{tpu_custom_call.1} parent=1 // pred_region
      %121 = dma.done [#allocation3], 128
    $region53: #{tpu_custom_call.1} parent=1 // pred_fallthru
      _
    // Predicated region
    $region54: #{tpu_custom_call.1} parent=1 // pred_check
      _
    $region55: #{tpu_custom_call.1} parent=1 // pred_check_branch
      %123 = sbr.rel (0) target = $region57
    $region56: #{tpu_custom_call.1} parent=1 // pred_region
      %124 = dma.done [#allocation6], 16
    $region57: #{tpu_custom_call.1} parent=1 // pred_fallthru
      _
    // Predicated region
    $region58: #{tpu_custom_call.1} parent=1 // pred_check
      _
    $region59: #{tpu_custom_call.1} parent=1 // pred_check_branch
      %126 = sbr.rel (0) target = $region61
    $region60: #{tpu_custom_call.1} parent=1 // pred_region
      %127 = dma.done [#allocation6], 64
    $region61: #{tpu_custom_call.1} parent=1 // pred_fallthru
      _
    // Predicated region
    $region62: #{tpu_custom_call.1} parent=1 // pred_check
      _
    $region63: #{tpu_custom_call.1} parent=1 // pred_check_branch
      %129 = sbr.rel (0) target = $region65
    $region64: #{tpu_custom_call.1} parent=1 // pred_region
      %130 = dma.done [#allocation9], 256
    $region65: #{tpu_custom_call.1} parent=1 // pred_fallthru
      _
    // Predicated region
    $region66: #{tpu_custom_call.1} parent=1 // pred_check
      _
    $region67: #{tpu_custom_call.1} parent=1 // pred_check_branch
      %132 = sbr.rel (0) target = $region69
    $region68: #{tpu_custom_call.1} parent=1 // pred_region
      %133 = dma.done [#allocation9], 16
    $region69: #{tpu_custom_call.1} parent=1 // pred_fallthru
      _
    // Predicated region
    $region70: #{tpu_custom_call.1} parent=1 // pred_check
      _
    $region71: #{tpu_custom_call.1} parent=1 // pred_check_branch
      %135 = sbr.rel (0) target = $region73
    $region72: #{tpu_custom_call.1} parent=1 // pred_region
      %136 = dma.done [#allocation12], 16
    $region73: #{tpu_custom_call.1} parent=1 // pred_fallthru
      _
    // Predicated region
    $region74: #{tpu_custom_call.1} parent=1 // pred_check
      _
    $region75: #{tpu_custom_call.1} parent=1 // pred_check_branch
      %138 = sbr.rel (0) target = $region77
    $region76: #{tpu_custom_call.1} parent=1 // pred_region
      %139 = dma.done [#allocation12], 256
    $region77: #{tpu_custom_call.1} parent=1 // pred_fallthru
      _
    // Predicated region
    $region78: #{tpu_custom_call.1} parent=1 // pred_check
      _
    $region79: #{tpu_custom_call.1} parent=1 // pred_check_branch
      %141 = sbr.rel (0) target = $region81
    $region80: #{tpu_custom_call.1} parent=1 // pred_region
      %142 = dma.done [#allocation15], 16
    $region81: #{tpu_custom_call.1} parent=1 // pred_fallthru
      _
    %v144 = vld [vmem:[#allocation2] sm:$0x1f]
    %v145 = vpack.c.bf16 %v144, %v144
    %v146 = vld [vmem:[%s3] sm:$0xf]
    %v147 = vld [vmem:[%s3 + $0x4] sm:$0xf]
    %v148 = vld [vmem:[%s3 + $0x8] sm:$0xf]
    %v149 = vld [vmem:[%s3 + $0xc] sm:$0xf]
    %v154 = vunpack.c.l.b16 %v146
    %v155 = vunpack.c.l.b16 %v147
    %v156 = vunpack.c.l.b16 %v148
    %v157 = vunpack.c.l.b16 %v149
    %v158 = vpack.c.b16 %v155, %v154
    %v159 = vpack.c.b16 %v157, %v156
    %vm162 = vcmask 261120
    %v164 = vsel %vm162, %v145, 0
    %166 = vmatprep.subr.bf16.mxu0 0
    %167 = vmatpush1.bf16.msra.mxu0 0
    %168 = vmatprep.subr.bf16.mxu0 0
    %169 = vmatpush1.bf16.msra.mxu0 0
    %170 = vmatprep.subr.bf16.mxu0 0
    %171 = vmatpush1.bf16.msra.mxu0 0
    %172 = vmatprep.subr.bf16.mxu0 0
    %173 = vmatpush1.bf16.msra.mxu0 0
    %174 = vmatprep.subr.bf16.mxu0 0
    %175 = vmatpush1.bf16.msra.mxu0 0
    %176 = vmatprep.subr.bf16.mxu0 0
    %177 = vmatpush1.bf16.msra.mxu0 0
    %178 = vmatprep.subr.bf16.mxu0 0
    %179 = vmatpush1.bf16.msra.mxu0 %v159
    %180 = vmatprep.subr.bf16.mxu0 0
    %181 = vmatpush1.bf16.msra.mxu0 %v158
    %182 = vmatprep.subr.bf16.mxu0 0
    %183 = vmatpush2.bf16.msra.mxu0 0
    %184 = vmatprep.subr.bf16.mxu0 0
    %185 = vmatpush2.bf16.msra.mxu0 0
    %186 = vmatprep.subr.bf16.mxu0 0
    %187 = vmatpush2.bf16.msra.mxu0 0
    %188 = vmatprep.subr.bf16.mxu0 0
    %189 = vmatpush2.bf16.msra.mxu0 0
    %190 = vmatprep.subr.bf16.mxu0 0
    %191 = vmatpush2.bf16.msra.mxu0 0
    %192 = vmatprep.subr.bf16.mxu0 0
    %193 = vmatpush2.bf16.msra.mxu0 0
    %194 = vmatprep.subr.bf16.mxu0 0
    %195 = vmatpush2.bf16.msra.mxu0 0
    %196 = vmatprep.subr.bf16.mxu0 0
    %197 = vmatpush2.bf16.msra.mxu0 0
    %198 = vmatprep.mubr.bf16.mxu0 0
    %199 = vmatmul.mubr.bf16.gmra.mxu0 %v164
    %v200 = vpop.f32.mrf.mxu0
    %v201 = vadd.f32 0.0, %v200
    %v202 = vpop.f32.mrf.mxu0
    %v203 = vpop.f32.mrf.mxu0
    %v204 = vpop.f32.mrf.mxu0
    %205 = vdwg.mxu0
    %v206 = vld [vmem:[#allocation10] sm:$0x1]
    %v208 = vlaneseq
    %v209 = vshrl.u32 %v208, 7
    %v210 = vsub.s32 0, %v209
    %v211 = vrot.slane %v206, %v210
    %v213 = vadd.f32 %v201, %v211
    %v214 = vld [vmem:[#allocation7] sm:$0xf]
    %v215 = vld [vmem:[#allocation8] sm:$0xf]
    %v216 = vld [vmem:[#allocation8 + $0x4] sm:$0xf]
    %v217 = vld [vmem:[#allocation8 + $0x8] sm:$0xf]
    %v218 = vld [vmem:[#allocation8 + $0xc] sm:$0xf]
    %v219 = vld [vmem:[%s6] sm:$0xf]
    %v220 = vld [vmem:[%s6 + $0x4] sm:$0xf]
    %v221 = vld [vmem:[%s6 + $0x8] sm:$0xf]
    %v222 = vld [vmem:[%s6 + $0xc] sm:$0xf]
    %v223 = vld [vmem:[#allocation13] sm:$0xf]
    %v224 = vld [vmem:[#allocation13 + $0x4] sm:$0xf]
    %v225 = vld [vmem:[#allocation13 + $0x8] sm:$0xf]
    %v226 = vld [vmem:[#allocation13 + $0xc] sm:$0xf]
    %v227 = vld [vmem:[#allocation11] sm:$0x1]
    %v228 = vld [vmem:[#allocation14] sm:$0x1]
    %v229 = vld [vmem:[%s10] sm:$0xf]
    %v230 = vld [vmem:[%s10 + $0x4] sm:$0xf]
    %v231 = vld [vmem:[%s10 + $0x8] sm:$0xf]
    %v232 = vld [vmem:[%s10 + $0xc] sm:$0xf]
    %v233 = vld [vmem:[%s11] sm:$0x1]
    %v234 = vld [vmem:[#allocation5] sm:$0x1]
    %v235 = vpack.c.bf16 %v234, %v234
    %v240 = vunpack.c.l.b16 %v223
    %v241 = vunpack.c.l.b16 %v224
    %v242 = vunpack.c.l.b16 %v225
    %v243 = vunpack.c.l.b16 %v226
    %v244 = vpack.c.b16 %v241, %v240
    %v245 = vpack.c.b16 %v243, %v242
    %v249 = vsel %vm162, %v235, 0
    %251 = vmatprep.subr.bf16.mxu0 0
    %252 = vmatpush1.bf16.msra.mxu0 0
    %253 = vmatprep.subr.bf16.mxu0 0
    %254 = vmatpush1.bf16.msra.mxu0 0
    %255 = vmatprep.subr.bf16.mxu0 0
    %256 = vmatpush1.bf16.msra.mxu0 0
    %257 = vmatprep.subr.bf16.mxu0 0
    %258 = vmatpush1.bf16.msra.mxu0 0
    %259 = vmatprep.subr.bf16.mxu0 0
    %260 = vmatpush1.bf16.msra.mxu0 0
    %261 = vmatprep.subr.bf16.mxu0 0
    %262 = vmatpush1.bf16.msra.mxu0 0
    %263 = vmatprep.subr.bf16.mxu0 0
    %264 = vmatpush1.bf16.msra.mxu0 %v245
    %265 = vmatprep.subr.bf16.mxu0 0
    %266 = vmatpush1.bf16.msra.mxu0 %v244
    %267 = vmatprep.subr.bf16.mxu0 0
    %268 = vmatpush2.bf16.msra.mxu0 0
    %269 = vmatprep.subr.bf16.mxu0 0
    %270 = vmatpush2.bf16.msra.mxu0 0
    %271 = vmatprep.subr.bf16.mxu0 0
    %272 = vmatpush2.bf16.msra.mxu0 0
    %273 = vmatprep.subr.bf16.mxu0 0
    %274 = vmatpush2.bf16.msra.mxu0 0
    %275 = vmatprep.subr.bf16.mxu0 0
    %276 = vmatpush2.bf16.msra.mxu0 0
    %277 = vmatprep.subr.bf16.mxu0 0
    %278 = vmatpush2.bf16.msra.mxu0 0
    %279 = vmatprep.subr.bf16.mxu0 0
    %280 = vmatpush2.bf16.msra.mxu0 0
    %281 = vmatprep.subr.bf16.mxu0 0
    %282 = vmatpush2.bf16.msra.mxu0 0
    %283 = vmatprep.mubr.bf16.mxu0 0
    %284 = vmatmul.mubr.bf16.gmra.mxu0 %v249
    %v285 = vpop.f32.mrf.mxu0
    %v286 = vadd.f32 %v228, %v285
    %v287 = vpop.f32.mrf.mxu0
    %v288 = vpop.f32.mrf.mxu0
    %v289 = vpop.f32.mrf.mxu0
    %290 = vdwg.mxu0
    %292 = vrot.lane.b32.xlu0 %v286, 64
    %v293 = vpop.permute.xlu0 %292
    %v295 = vadd.f32 %v201, %v293
    %vm296 = vcmask 311552
    %v297 = vsel %vm296, %v295, -inf
    %298 = vmax.xlane.f32.xlu0 %v297
    %v299 = vpop.xlane.xlu0 %298
    %v300 = vsub.f32 %v295, %v299
    %v301 = vmul.f32 %v300, 1.442695
    %v302 = vpow.pop %v301
    %304 = vrot.lane.b32.xlu0 %v302, 96
    %v305 = vpop.permute.xlu0 %304
    %vm307 = vcmask 49152
    %v308 = vsel %vm307, %v305, 0.0
    %309 = vadd.xlane.f32.xlu0 %v308
    %v310 = vpop.xlane.xlu0 %309
    %v311 = vrcp.pop %v310
    %v312 = vmul.f32 %v302, %v311
    %314 = vrot.lane.b32.xlu0 %v312, 96
    %v315 = vpop.permute.xlu0 %314
    %317 = vst.msk [vmem:[#allocation19] sm:$0x1] %vm307, %v315
    %v318 = vpack.c.bf16 %v312, %v312
    %320 = vrot.lane.b32.xlu0 %v318, 96
    %v321 = vpop.permute.xlu0 %320
    %vm322 = vcmask 56320
    %v324 = vsel %vm322, %v321, 0
    %vm326 = vcmask 1042432
    %vm327 = vcmask 1043456
    %v328 = vsel %vm326, 4294967295, 65535
    %v329 = vsel %vm327, %v328, 0
    %v331 = vand.u32 %v214, %v329
    %333 = vmatprep.subr.bf16.mxu0 0
    %334 = vmatpush1.bf16.msra.mxu0 0
    %335 = vmatprep.subr.bf16.mxu0 0
    %336 = vmatpush1.bf16.msra.mxu0 0
    %337 = vmatprep.subr.bf16.mxu0 0
    %338 = vmatpush1.bf16.msra.mxu0 0
    %339 = vmatprep.subr.bf16.mxu0 0
    %340 = vmatpush1.bf16.msra.mxu0 0
    %341 = vmatprep.subr.bf16.mxu0 0
    %342 = vmatpush1.bf16.msra.mxu0 0
    %343 = vmatprep.subr.bf16.mxu0 0
    %344 = vmatpush1.bf16.msra.mxu0 0
    %345 = vmatprep.subr.bf16.mxu0 0
    %346 = vmatpush1.bf16.msra.mxu0 0
    %347 = vmatprep.subr.bf16.mxu0 0
    %348 = vmatpush1.bf16.msra.mxu0 %v331
    %349 = vmatprep.subr.bf16.mxu0 0
    %350 = vmatpush2.bf16.msra.mxu0 0
    %351 = vmatprep.subr.bf16.mxu0 0
    %352 = vmatpush2.bf16.msra.mxu0 0
    %353 = vmatprep.subr.bf16.mxu0 0
    %354 = vmatpush2.bf16.msra.mxu0 0
    %355 = vmatprep.subr.bf16.mxu0 0
    %356 = vmatpush2.bf16.msra.mxu0 0
    %357 = vmatprep.subr.bf16.mxu0 0
    %358 = vmatpush2.bf16.msra.mxu0 0
    %359 = vmatprep.subr.bf16.mxu0 0
    %360 = vmatpush2.bf16.msra.mxu0 0
    %361 = vmatprep.subr.bf16.mxu0 0
    %362 = vmatpush2.bf16.msra.mxu0 0
    %363 = vmatprep.subr.bf16.mxu0 0
    %364 = vmatpush2.bf16.msra.mxu0 0
    %365 = vmatprep.mubr.bf16.mxu0 0
    %366 = vmatmul.mubr.bf16.gmra.mxu0 %v324
    %v367 = vpop.f32.mrf.mxu0
    %v368 = vadd.f32 0.0, %v367
    %v369 = vpop.f32.mrf.mxu0
    %v370 = vpop.f32.mrf.mxu0
    %v371 = vpop.f32.mrf.mxu0
    %372 = vdwg.mxu0
    %v373 = vpack.c.bf16 %v368, %v368
    %v378 = vunpack.c.l.b16 %v215
    %v379 = vunpack.c.l.b16 %v216
    %v380 = vunpack.c.l.b16 %v217
    %v381 = vunpack.c.l.b16 %v218
    %v382 = vpack.c.b16 %v379, %v378
    %v383 = vpack.c.b16 %v381, %v380
    %v387 = vsel %vm162, %v373, 0
    %389 = vmatprep.subr.bf16.mxu0 0
    %390 = vmatpush1.bf16.msra.mxu0 0
    %391 = vmatprep.subr.bf16.mxu0 0
    %392 = vmatpush1.bf16.msra.mxu0 0
    %393 = vmatprep.subr.bf16.mxu0 0
    %394 = vmatpush1.bf16.msra.mxu0 0
    %395 = vmatprep.subr.bf16.mxu0 0
    %396 = vmatpush1.bf16.msra.mxu0 0
    %397 = vmatprep.subr.bf16.mxu0 0
    %398 = vmatpush1.bf16.msra.mxu0 0
    %399 = vmatprep.subr.bf16.mxu0 0
    %400 = vmatpush1.bf16.msra.mxu0 0
    %401 = vmatprep.subr.bf16.mxu0 0
    %402 = vmatpush1.bf16.msra.mxu0 %v383
    %403 = vmatprep.subr.bf16.mxu0 0
    %404 = vmatpush1.bf16.msra.mxu0 %v382
    %405 = vmatprep.subr.bf16.mxu0 0
    %406 = vmatpush2.bf16.msra.mxu0 0
    %407 = vmatprep.subr.bf16.mxu0 0
    %408 = vmatpush2.bf16.msra.mxu0 0
    %409 = vmatprep.subr.bf16.mxu0 0
    %410 = vmatpush2.bf16.msra.mxu0 0
    %411 = vmatprep.subr.bf16.mxu0 0
    %412 = vmatpush2.bf16.msra.mxu0 0
    %413 = vmatprep.subr.bf16.mxu0 0
    %414 = vmatpush2.bf16.msra.mxu0 0
    %415 = vmatprep.subr.bf16.mxu0 0
    %416 = vmatpush2.bf16.msra.mxu0 0
    %417 = vmatprep.subr.bf16.mxu0 0
    %418 = vmatpush2.bf16.msra.mxu0 0
    %419 = vmatprep.subr.bf16.mxu0 0
    %420 = vmatpush2.bf16.msra.mxu0 0
    %421 = vmatprep.mubr.bf16.mxu0 0
    %422 = vmatmul.mubr.bf16.gmra.mxu0 %v387
    %v423 = vpop.f32.mrf.mxu0
    %v424 = vadd.f32 0.0, %v423
    %v425 = vpop.f32.mrf.mxu0
    %v426 = vpop.f32.mrf.mxu0
    %v427 = vpop.f32.mrf.mxu0
    %428 = vdwg.mxu0
    %v429 = vadd.f32 %v213, %v424
    %v430 = vmax.f32 %v429, 0.0
    %v431 = vpack.c.bf16 %v430, %v430
    %v436 = vunpack.c.l.b16 %v219
    %v437 = vunpack.c.l.b16 %v220
    %v438 = vunpack.c.l.b16 %v221
    %v439 = vunpack.c.l.b16 %v222
    %v440 = vpack.c.b16 %v437, %v436
    %v441 = vpack.c.b16 %v439, %v438
    %v445 = vsel %vm162, %v431, 0
    %447 = vmatprep.subr.bf16.mxu0 0
    %448 = vmatpush1.bf16.msra.mxu0 0
    %449 = vmatprep.subr.bf16.mxu0 0
    %450 = vmatpush1.bf16.msra.mxu0 0
    %451 = vmatprep.subr.bf16.mxu0 0
    %452 = vmatpush1.bf16.msra.mxu0 0
    %453 = vmatprep.subr.bf16.mxu0 0
    %454 = vmatpush1.bf16.msra.mxu0 0
    %455 = vmatprep.subr.bf16.mxu0 0
    %456 = vmatpush1.bf16.msra.mxu0 0
    %457 = vmatprep.subr.bf16.mxu0 0
    %458 = vmatpush1.bf16.msra.mxu0 0
    %459 = vmatprep.subr.bf16.mxu0 0
    %460 = vmatpush1.bf16.msra.mxu0 %v441
    %461 = vmatprep.subr.bf16.mxu0 0
    %462 = vmatpush1.bf16.msra.mxu0 %v440
    %463 = vmatprep.subr.bf16.mxu0 0
    %464 = vmatpush2.bf16.msra.mxu0 0
    %465 = vmatprep.subr.bf16.mxu0 0
    %466 = vmatpush2.bf16.msra.mxu0 0
    %467 = vmatprep.subr.bf16.mxu0 0
    %468 = vmatpush2.bf16.msra.mxu0 0
    %469 = vmatprep.subr.bf16.mxu0 0
    %470 = vmatpush2.bf16.msra.mxu0 0
    %471 = vmatprep.subr.bf16.mxu0 0
    %472 = vmatpush2.bf16.msra.mxu0 0
    %473 = vmatprep.subr.bf16.mxu0 0
    %474 = vmatpush2.bf16.msra.mxu0 0
    %475 = vmatprep.subr.bf16.mxu0 0
    %476 = vmatpush2.bf16.msra.mxu0 0
    %477 = vmatprep.subr.bf16.mxu0 0
    %478 = vmatpush2.bf16.msra.mxu0 0
    %479 = vmatprep.mubr.bf16.mxu0 0
    %480 = vmatmul.mubr.bf16.gmra.mxu0 %v445
    %v481 = vpop.f32.mrf.mxu0
    %v482 = vadd.f32 %v227, %v481
    %v483 = vpop.f32.mrf.mxu0
    %v484 = vpop.f32.mrf.mxu0
    %v485 = vpop.f32.mrf.mxu0
    %486 = vdwg.mxu0
    %v487 = vadd.f32 %v482, %v286
    %v488 = vsub.f32 0.0, %v487
    %v489 = vmul.f32 %v488, 1.442695
    %v490 = vpow.pop %v489
    %v491 = vadd.f32 %v490, 1.0
    %v492 = vrcp.pop %v491
    %v493 = vmul.f32 1.0, %v492
    %v494 = vmul.f32 %v493, %v293
    %496 = vrot.lane.b32.xlu0 %v494, 64
    %v497 = vpop.permute.xlu0 %496
    %v499 = vadd.f32 %v482, %v497
    %v500 = vtanh.pop %v499
    %v501 = vsub.f32 1.0, %v493
    %503 = vrot.lane.b32.xlu0 %v500, 96
    %v504 = vpop.permute.xlu0 %503
    %v506 = vmul.f32 %v501, %v504
    %v508 = vlaneseq
    %v509 = vshrl.u32 %v508, 7
    %v510 = vsub.s32 0, %v509
    %v511 = vrot.slane %v234, %v510
    %512 = vrot.lane.b32.xlu0 %v511, 32
    %v513 = vpop.permute.xlu0 %512
    %v515 = vmul.f32 %v493, %v513
    %v516 = vadd.f32 %v506, %v515
    %518 = vrot.lane.b32.xlu0 %v516, 96
    %v519 = vpop.permute.xlu0 %518
    %vm521 = vcmask 253952
    %522 = vst.msk [vmem:[#allocation17] sm:$0x1] %vm521, %v519
    %v523 = vpack.c.bf16 %v516, %v516
    %525 = vrot.lane.b32.xlu0 %v523, 96
    %v526 = vpop.permute.xlu0 %525
    %v531 = vunpack.c.l.b16 %v229
    %v532 = vunpack.c.l.b16 %v230
    %v533 = vunpack.c.l.b16 %v231
    %v534 = vunpack.c.l.b16 %v232
    %v535 = vpack.c.b16 %v532, %v531
    %v536 = vpack.c.b16 %v534, %v533
    %v540 = vsel %vm162, %v526, 0
    %542 = vmatprep.subr.bf16.mxu0 0
    %543 = vmatpush1.bf16.msra.mxu0 0
    %544 = vmatprep.subr.bf16.mxu0 0
    %545 = vmatpush1.bf16.msra.mxu0 0
    %546 = vmatprep.subr.bf16.mxu0 0
    %547 = vmatpush1.bf16.msra.mxu0 0
    %548 = vmatprep.subr.bf16.mxu0 0
    %549 = vmatpush1.bf16.msra.mxu0 0
    %550 = vmatprep.subr.bf16.mxu0 0
    %551 = vmatpush1.bf16.msra.mxu0 0
    %552 = vmatprep.subr.bf16.mxu0 0
    %553 = vmatpush1.bf16.msra.mxu0 0
    %554 = vmatprep.subr.bf16.mxu0 0
    %555 = vmatpush1.bf16.msra.mxu0 %v536
    %556 = vmatprep.subr.bf16.mxu0 0
    %557 = vmatpush1.bf16.msra.mxu0 %v535
    %558 = vmatprep.subr.bf16.mxu0 0
    %559 = vmatpush2.bf16.msra.mxu0 0
    %560 = vmatprep.subr.bf16.mxu0 0
    %561 = vmatpush2.bf16.msra.mxu0 0
    %562 = vmatprep.subr.bf16.mxu0 0
    %563 = vmatpush2.bf16.msra.mxu0 0
    %564 = vmatprep.subr.bf16.mxu0 0
    %565 = vmatpush2.bf16.msra.mxu0 0
    %566 = vmatprep.subr.bf16.mxu0 0
    %567 = vmatpush2.bf16.msra.mxu0 0
    %568 = vmatprep.subr.bf16.mxu0 0
    %569 = vmatpush2.bf16.msra.mxu0 0
    %570 = vmatprep.subr.bf16.mxu0 0
    %571 = vmatpush2.bf16.msra.mxu0 0
    %572 = vmatprep.subr.bf16.mxu0 0
    %573 = vmatpush2.bf16.msra.mxu0 0
    %574 = vmatprep.mubr.bf16.mxu0 0
    %575 = vmatmul.mubr.bf16.gmra.mxu0 %v540
    %v576 = vpop.f32.mrf.mxu0
    %v577 = vadd.f32 %v233, %v576
    %v578 = vpop.f32.mrf.mxu0
    %v579 = vpop.f32.mrf.mxu0
    %v580 = vpop.f32.mrf.mxu0
    %581 = vdwg.mxu0
    %vm582 = vcmask 122880
    %v583 = vsel %vm582, %v577, -inf
    %584 = vmax.xlane.f32.xlu0 %v583
    %v585 = vpop.xlane.xlu0 %584
    %v586 = vsub.f32 %v577, %v585
    %v587 = vmul.f32 %v586, 1.442695
    %v588 = vpow.pop %v587
    %v589 = vsel %vm582, %v588, 0.0
    %590 = vadd.xlane.f32.xlu0 %v589
    %v591 = vpop.xlane.xlu0 %590
    %v592 = vlog2.pop %v591
    %v593 = vmul.f32 %v592, 0.6931472
    %v594 = vsub.f32 %v586, %v593
    %595 = vst.msk [vmem:[#allocation16] sm:$0x1] %vm582, %v594
    %596 = vmatprep.subr.bf16.mxu0 0
    %597 = vmatpush1.bf16.msra.mxu0 0
    %598 = vmatprep.subr.bf16.mxu0 0
    %599 = vmatpush1.bf16.msra.mxu0 0
    %600 = vmatprep.subr.bf16.mxu0 0
    %601 = vmatpush1.bf16.msra.mxu0 0
    %602 = vmatprep.subr.bf16.mxu0 0
    %603 = vmatpush1.bf16.msra.mxu0 0
    %604 = vmatprep.subr.bf16.mxu0 0
    %605 = vmatpush1.bf16.msra.mxu0 0
    %606 = vmatprep.subr.bf16.mxu0 0
    %607 = vmatpush1.bf16.msra.mxu0 0
    %608 = vmatprep.subr.bf16.mxu0 0
    %609 = vmatpush1.bf16.msra.mxu0 %v245
    %610 = vmatprep.subr.bf16.mxu0 0
    %611 = vmatpush1.bf16.msra.mxu0 %v244
    %612 = vmatprep.subr.bf16.mxu0 0
    %613 = vmatpush2.bf16.msra.mxu0 0
    %614 = vmatprep.subr.bf16.mxu0 0
    %615 = vmatpush2.bf16.msra.mxu0 0
    %616 = vmatprep.subr.bf16.mxu0 0
    %617 = vmatpush2.bf16.msra.mxu0 0
    %618 = vmatprep.subr.bf16.mxu0 0
    %619 = vmatpush2.bf16.msra.mxu0 0
    %620 = vmatprep.subr.bf16.mxu0 0
    %621 = vmatpush2.bf16.msra.mxu0 0
    %622 = vmatprep.subr.bf16.mxu0 0
    %623 = vmatpush2.bf16.msra.mxu0 0
    %624 = vmatprep.subr.bf16.mxu0 0
    %625 = vmatpush2.bf16.msra.mxu0 0
    %626 = vmatprep.subr.bf16.mxu0 0
    %627 = vmatpush2.bf16.msra.mxu0 0
    %628 = vmatprep.mubr.bf16.mxu0 0
    %629 = vmatmul.mubr.bf16.gmra.mxu0 %v540
    %v630 = vpop.f32.mrf.mxu0
    %v631 = vadd.f32 %v228, %v630
    %v632 = vpop.f32.mrf.mxu0
    %v633 = vpop.f32.mrf.mxu0
    %v634 = vpop.f32.mrf.mxu0
    %635 = vdwg.mxu0
    %v637 = vrot.slane %v631, 7
    %638 = vrot.lane.b32.xlu0 %v637, 64
    %v639 = vpop.permute.xlu0 %638
    %v641 = vadd.f32 %v201, %v639
    %vm642 = vcmask 312577
    %v643 = vsel %vm642, %v641, -inf
    %644 = vmax.xlane.f32.xlu0 %v643
    %v645 = vpop.xlane.xlu0 %644
    %v646 = vsub.f32 %v641, %v645
    %v647 = vmul.f32 %v646, 1.442695
    %v648 = vpow.pop %v647
    %650 = vrot.lane.b32.xlu0 %v648, 96
    %v651 = vpop.permute.xlu0 %650
    %vm653 = vcmask 50177
    %v654 = vsel %vm653, %v651, 0.0
    %655 = vadd.xlane.f32.xlu0 %v654
    %v656 = vpop.xlane.xlu0 %655
    %v657 = vrcp.pop %v656
    %v658 = vmul.f32 %v648, %v657
    %660 = vrot.lane.b32.xlu0 %v658, 96
    %v661 = vpop.permute.xlu0 %660
    %663 = vst.msk [vmem:[#allocation19] sm:$0x2] %vm653, %v661
    %v664 = vpack.c.bf16 %v658, %v658
    %v666 = vshrl.u32 %v664, 16
    %668 = vrot.lane.b32.xlu0 %v666, 96
    %v669 = vpop.permute.xlu0 %668
    %v671 = vsel %vm322, %v669, 0
    %673 = vmatprep.subr.bf16.mxu0 0
    %674 = vmatpush1.bf16.msra.mxu0 0
    %675 = vmatprep.subr.bf16.mxu0 0
    %676 = vmatpush1.bf16.msra.mxu0 0
    %677 = vmatprep.subr.bf16.mxu0 0
    %678 = vmatpush1.bf16.msra.mxu0 0
    %679 = vmatprep.subr.bf16.mxu0 0
    %680 = vmatpush1.bf16.msra.mxu0 0
    %681 = vmatprep.subr.bf16.mxu0 0
    %682 = vmatpush1.bf16.msra.mxu0 0
    %683 = vmatprep.subr.bf16.mxu0 0
    %684 = vmatpush1.bf16.msra.mxu0 0
    %685 = vmatprep.subr.bf16.mxu0 0
    %686 = vmatpush1.bf16.msra.mxu0 0
    %687 = vmatprep.subr.bf16.mxu0 0
    %688 = vmatpush1.bf16.msra.mxu0 %v331
    %689 = vmatprep.subr.bf16.mxu0 0
    %690 = vmatpush2.bf16.msra.mxu0 0
    %691 = vmatprep.subr.bf16.mxu0 0
    %692 = vmatpush2.bf16.msra.mxu0 0
    %693 = vmatprep.subr.bf16.mxu0 0
    %694 = vmatpush2.bf16.msra.mxu0 0
    %695 = vmatprep.subr.bf16.mxu0 0
    %696 = vmatpush2.bf16.msra.mxu0 0
    %697 = vmatprep.subr.bf16.mxu0 0
    %698 = vmatpush2.bf16.msra.mxu0 0
    %699 = vmatprep.subr.bf16.mxu0 0
    %700 = vmatpush2.bf16.msra.mxu0 0
    %701 = vmatprep.subr.bf16.mxu0 0
    %702 = vmatpush2.bf16.msra.mxu0 0
    %703 = vmatprep.subr.bf16.mxu0 0
    %704 = vmatpush2.bf16.msra.mxu0 0
    %705 = vmatprep.mubr.bf16.mxu0 0
    %706 = vmatmul.mubr.bf16.gmra.mxu0 %v671
    %v707 = vpop.f32.mrf.mxu0
    %v708 = vadd.f32 0.0, %v707
    %v709 = vpop.f32.mrf.mxu0
    %v710 = vpop.f32.mrf.mxu0
    %v711 = vpop.f32.mrf.mxu0
    %712 = vdwg.mxu0
    %v713 = vpack.c.bf16 %v708, %v708
    %v715 = vsel %vm162, %v713, 0
    %717 = vmatprep.subr.bf16.mxu0 0
    %718 = vmatpush1.bf16.msra.mxu0 0
    %719 = vmatprep.subr.bf16.mxu0 0
    %720 = vmatpush1.bf16.msra.mxu0 0
    %721 = vmatprep.subr.bf16.mxu0 0
    %722 = vmatpush1.bf16.msra.mxu0 0
    %723 = vmatprep.subr.bf16.mxu0 0
    %724 = vmatpush1.bf16.msra.mxu0 0
    %725 = vmatprep.subr.bf16.mxu0 0
    %726 = vmatpush1.bf16.msra.mxu0 0
    %727 = vmatprep.subr.bf16.mxu0 0
    %728 = vmatpush1.bf16.msra.mxu0 0
    %729 = vmatprep.subr.bf16.mxu0 0
    %730 = vmatpush1.bf16.msra.mxu0 %v383
    %731 = vmatprep.subr.bf16.mxu0 0
    %732 = vmatpush1.bf16.msra.mxu0 %v382
    %733 = vmatprep.subr.bf16.mxu0 0
    %734 = vmatpush2.bf16.msra.mxu0 0
    %735 = vmatprep.subr.bf16.mxu0 0
    %736 = vmatpush2.bf16.msra.mxu0 0
    %737 = vmatprep.subr.bf16.mxu0 0
    %738 = vmatpush2.bf16.msra.mxu0 0
    %739 = vmatprep.subr.bf16.mxu0 0
    %740 = vmatpush2.bf16.msra.mxu0 0
    %741 = vmatprep.subr.bf16.mxu0 0
    %742 = vmatpush2.bf16.msra.mxu0 0
    %743 = vmatprep.subr.bf16.mxu0 0
    %744 = vmatpush2.bf16.msra.mxu0 0
    %745 = vmatprep.subr.bf16.mxu0 0
    %746 = vmatpush2.bf16.msra.mxu0 0
    %747 = vmatprep.subr.bf16.mxu0 0
    %748 = vmatpush2.bf16.msra.mxu0 0
    %749 = vmatprep.mubr.bf16.mxu0 0
    %750 = vmatmul.mubr.bf16.gmra.mxu0 %v715
    %v751 = vpop.f32.mrf.mxu0
    %v752 = vadd.f32 0.0, %v751
    %v753 = vpop.f32.mrf.mxu0
    %v754 = vpop.f32.mrf.mxu0
    %v755 = vpop.f32.mrf.mxu0
    %756 = vdwg.mxu0
    %v758 = vrot.slane %v752, 7
    %v760 = vadd.f32 %v213, %v758
    %v761 = vmax.f32 %v760, 0.0
    %v762 = vpack.c.bf16 %v761, %v761
    %v764 = vshrl.u32 %v762, 16
    %v767 = vsel %vm162, %v764, 0
    %769 = vmatprep.subr.bf16.mxu0 0
    %770 = vmatpush1.bf16.msra.mxu0 0
    %771 = vmatprep.subr.bf16.mxu0 0
    %772 = vmatpush1.bf16.msra.mxu0 0
    %773 = vmatprep.subr.bf16.mxu0 0
    %774 = vmatpush1.bf16.msra.mxu0 0
    %775 = vmatprep.subr.bf16.mxu0 0
    %776 = vmatpush1.bf16.msra.mxu0 0
    %777 = vmatprep.subr.bf16.mxu0 0
    %778 = vmatpush1.bf16.msra.mxu0 0
    %779 = vmatprep.subr.bf16.mxu0 0
    %780 = vmatpush1.bf16.msra.mxu0 0
    %781 = vmatprep.subr.bf16.mxu0 0
    %782 = vmatpush1.bf16.msra.mxu0 %v441
    %783 = vmatprep.subr.bf16.mxu0 0
    %784 = vmatpush1.bf16.msra.mxu0 %v440
    %785 = vmatprep.subr.bf16.mxu0 0
    %786 = vmatpush2.bf16.msra.mxu0 0
    %787 = vmatprep.subr.bf16.mxu0 0
    %788 = vmatpush2.bf16.msra.mxu0 0
    %789 = vmatprep.subr.bf16.mxu0 0
    %790 = vmatpush2.bf16.msra.mxu0 0
    %791 = vmatprep.subr.bf16.mxu0 0
    %792 = vmatpush2.bf16.msra.mxu0 0
    %793 = vmatprep.subr.bf16.mxu0 0
    %794 = vmatpush2.bf16.msra.mxu0 0
    %795 = vmatprep.subr.bf16.mxu0 0
    %796 = vmatpush2.bf16.msra.mxu0 0
    %797 = vmatprep.subr.bf16.mxu0 0
    %798 = vmatpush2.bf16.msra.mxu0 0
    %799 = vmatprep.subr.bf16.mxu0 0
    %800 = vmatpush2.bf16.msra.mxu0 0
    %801 = vmatprep.mubr.bf16.mxu0 0
    %802 = vmatmul.mubr.bf16.gmra.mxu0 %v767
    %v803 = vpop.f32.mrf.mxu0
    %v804 = vadd.f32 %v227, %v803
    %v805 = vpop.f32.mrf.mxu0
    %v806 = vpop.f32.mrf.mxu0
    %v807 = vpop.f32.mrf.mxu0
    %808 = vdwg.mxu0
    %v809 = vadd.f32 %v804, %v631
    %v810 = vsub.f32 0.0, %v809
    %v811 = vmul.f32 %v810, 1.442695
    %v812 = vpow.pop %v811
    %v813 = vadd.f32 %v812, 1.0
    %v814 = vrcp.pop %v813
    %v815 = vmul.f32 1.0, %v814
    %816 = vrot.lane.b32.xlu0 %v631, 64
    %v817 = vpop.permute.xlu0 %816
    %v819 = vmul.f32 %v815, %v817
    %821 = vrot.lane.b32.xlu0 %v819, 64
    %v822 = vpop.permute.xlu0 %821
    %v824 = vadd.f32 %v804, %v822
    %v825 = vtanh.pop %v824
    %v826 = vsub.f32 1.0, %v815
    %828 = vrot.lane.b32.xlu0 %v825, 96
    %v829 = vpop.permute.xlu0 %828
    %v831 = vmul.f32 %v826, %v829
    %v832 = vmul.f32 %v815, %v516
    %v833 = vadd.f32 %v831, %v832
    %835 = vrot.lane.b32.xlu0 %v833, 96
    %v836 = vpop.permute.xlu0 %835
    %838 = vst.msk [vmem:[#allocation17 + $0x1] sm:$0x1] %vm521, %v836
    %v839 = vpack.c.bf16 %v833, %v833
    %841 = vrot.lane.b32.xlu0 %v839, 96
    %v842 = vpop.permute.xlu0 %841
    %v844 = vsel %vm162, %v842, 0
    %846 = vmatprep.subr.bf16.mxu0 0
    %847 = vmatpush1.bf16.msra.mxu0 0
    %848 = vmatprep.subr.bf16.mxu0 0
    %849 = vmatpush1.bf16.msra.mxu0 0
    %850 = vmatprep.subr.bf16.mxu0 0
    %851 = vmatpush1.bf16.msra.mxu0 0
    %852 = vmatprep.subr.bf16.mxu0 0
    %853 = vmatpush1.bf16.msra.mxu0 0
    %854 = vmatprep.subr.bf16.mxu0 0
    %855 = vmatpush1.bf16.msra.mxu0 0
    %856 = vmatprep.subr.bf16.mxu0 0
    %857 = vmatpush1.bf16.msra.mxu0 0
    %858 = vmatprep.subr.bf16.mxu0 0
    %859 = vmatpush1.bf16.msra.mxu0 %v536
    %860 = vmatprep.subr.bf16.mxu0 0
    %861 = vmatpush1.bf16.msra.mxu0 %v535
    %862 = vmatprep.subr.bf16.mxu0 0
    %863 = vmatpush2.bf16.msra.mxu0 0
    %864 = vmatprep.subr.bf16.mxu0 0
    %865 = vmatpush2.bf16.msra.mxu0 0
    %866 = vmatprep.subr.bf16.mxu0 0
    %867 = vmatpush2.bf16.msra.mxu0 0
    %868 = vmatprep.subr.bf16.mxu0 0
    %869 = vmatpush2.bf16.msra.mxu0 0
    %870 = vmatprep.subr.bf16.mxu0 0
    %871 = vmatpush2.bf16.msra.mxu0 0
    %872 = vmatprep.subr.bf16.mxu0 0
    %873 = vmatpush2.bf16.msra.mxu0 0
    %874 = vmatprep.subr.bf16.mxu0 0
    %875 = vmatpush2.bf16.msra.mxu0 0
    %876 = vmatprep.subr.bf16.mxu0 0
    %877 = vmatpush2.bf16.msra.mxu0 0
    %878 = vmatprep.mubr.bf16.mxu0 0
    %879 = vmatmul.mubr.bf16.gmra.mxu0 %v844
    %v880 = vpop.f32.mrf.mxu0
    %v881 = vadd.f32 %v233, %v880
    %v882 = vpop.f32.mrf.mxu0
    %v883 = vpop.f32.mrf.mxu0
    %v884 = vpop.f32.mrf.mxu0
    %885 = vdwg.mxu0
    %v886 = vsel %vm582, %v881, -inf
    %887 = vmax.xlane.f32.xlu0 %v886
    %v888 = vpop.xlane.xlu0 %887
    %v889 = vsub.f32 %v881, %v888
    %v890 = vmul.f32 %v889, 1.442695
    %v891 = vpow.pop %v890
    %v892 = vsel %vm582, %v891, 0.0
    %893 = vadd.xlane.f32.xlu0 %v892
    %v894 = vpop.xlane.xlu0 %893
    %v895 = vlog2.pop %v894
    %v896 = vmul.f32 %v895, 0.6931472
    %v897 = vsub.f32 %v889, %v896
    %898 = vst.msk [vmem:[#allocation16 + $0x1] sm:$0x1] %vm582, %v897
    %899 = vmatprep.subr.bf16.mxu0 0
    %900 = vmatpush1.bf16.msra.mxu0 0
    %901 = vmatprep.subr.bf16.mxu0 0
    %902 = vmatpush1.bf16.msra.mxu0 0
    %903 = vmatprep.subr.bf16.mxu0 0
    %904 = vmatpush1.bf16.msra.mxu0 0
    %905 = vmatprep.subr.bf16.mxu0 0
    %906 = vmatpush1.bf16.msra.mxu0 0
    %907 = vmatprep.subr.bf16.mxu0 0
    %908 = vmatpush1.bf16.msra.mxu0 0
    %909 = vmatprep.subr.bf16.mxu0 0
    %910 = vmatpush1.bf16.msra.mxu0 0
    %911 = vmatprep.subr.bf16.mxu0 0
    %912 = vmatpush1.bf16.msra.mxu0 %v245
    %913 = vmatprep.subr.bf16.mxu0 0
    %914 = vmatpush1.bf16.msra.mxu0 %v244
    %915 = vmatprep.subr.bf16.mxu0 0
    %916 = vmatpush2.bf16.msra.mxu0 0
    %917 = vmatprep.subr.bf16.mxu0 0
    %918 = vmatpush2.bf16.msra.mxu0 0
    %919 = vmatprep.subr.bf16.mxu0 0
    %920 = vmatpush2.bf16.msra.mxu0 0
    %921 = vmatprep.subr.bf16.mxu0 0
    %922 = vmatpush2.bf16.msra.mxu0 0
    %923 = vmatprep.subr.bf16.mxu0 0
    %924 = vmatpush2.bf16.msra.mxu0 0
    %925 = vmatprep.subr.bf16.mxu0 0
    %926 = vmatpush2.bf16.msra.mxu0 0
    %927 = vmatprep.subr.bf16.mxu0 0
    %928 = vmatpush2.bf16.msra.mxu0 0
    %929 = vmatprep.subr.bf16.mxu0 0
    %930 = vmatpush2.bf16.msra.mxu0 0
    %931 = vmatprep.mubr.bf16.mxu0 0
    %932 = vmatmul.mubr.bf16.gmra.mxu0 %v844
    %v933 = vpop.f32.mrf.mxu0
    %v934 = vadd.f32 %v228, %v933
    %v935 = vpop.f32.mrf.mxu0
    %v936 = vpop.f32.mrf.mxu0
    %v937 = vpop.f32.mrf.mxu0
    %938 = vdwg.mxu0
    %v940 = vrot.slane %v934, 6
    %941 = vrot.lane.b32.xlu0 %v940, 64
    %v942 = vpop.permute.xlu0 %941
    %v944 = vadd.f32 %v201, %v942
    %vm945 = vcmask 313602
    %v946 = vsel %vm945, %v944, -inf
    %947 = vmax.xlane.f32.xlu0 %v946
    %v948 = vpop.xlane.xlu0 %947
    %v949 = vsub.f32 %v944, %v948
    %v950 = vmul.f32 %v949, 1.442695
    %v951 = vpow.pop %v950
    %953 = vrot.lane.b32.xlu0 %v951, 96
    %v954 = vpop.permute.xlu0 %953
    %vm956 = vcmask 51202
    %v957 = vsel %vm956, %v954, 0.0
    %958 = vadd.xlane.f32.xlu0 %v957
    %v959 = vpop.xlane.xlu0 %958
    %v960 = vrcp.pop %v959
    %v961 = vmul.f32 %v951, %v960
    %963 = vrot.lane.b32.xlu0 %v961, 96
    %v964 = vpop.permute.xlu0 %963
    %966 = vst.msk [vmem:[#allocation19] sm:$0x4] %vm956, %v964
    %v967 = vpack.c.bf16 %v961, %v961
    %v969 = vrot.slane %v967, 1
    %970 = vrot.lane.b32.xlu0 %v969, 96
    %v971 = vpop.permute.xlu0 %970
    %v973 = vsel %vm322, %v971, 0
    %975 = vmatprep.subr.bf16.mxu0 0
    %976 = vmatpush1.bf16.msra.mxu0 0
    %977 = vmatprep.subr.bf16.mxu0 0
    %978 = vmatpush1.bf16.msra.mxu0 0
    %979 = vmatprep.subr.bf16.mxu0 0
    %980 = vmatpush1.bf16.msra.mxu0 0
    %981 = vmatprep.subr.bf16.mxu0 0
    %982 = vmatpush1.bf16.msra.mxu0 0
    %983 = vmatprep.subr.bf16.mxu0 0
    %984 = vmatpush1.bf16.msra.mxu0 0
    %985 = vmatprep.subr.bf16.mxu0 0
    %986 = vmatpush1.bf16.msra.mxu0 0
    %987 = vmatprep.subr.bf16.mxu0 0
    %988 = vmatpush1.bf16.msra.mxu0 0
    %989 = vmatprep.subr.bf16.mxu0 0
    %990 = vmatpush1.bf16.msra.mxu0 %v331
    %991 = vmatprep.subr.bf16.mxu0 0
    %992 = vmatpush2.bf16.msra.mxu0 0
    %993 = vmatprep.subr.bf16.mxu0 0
    %994 = vmatpush2.bf16.msra.mxu0 0
    %995 = vmatprep.subr.bf16.mxu0 0
    %996 = vmatpush2.bf16.msra.mxu0 0
    %997 = vmatprep.subr.bf16.mxu0 0
    %998 = vmatpush2.bf16.msra.mxu0 0
    %999 = vmatprep.subr.bf16.mxu0 0
    %1000 = vmatpush2.bf16.msra.mxu0 0
    %1001 = vmatprep.subr.bf16.mxu0 0
    %1002 = vmatpush2.bf16.msra.mxu0 0
    %1003 = vmatprep.subr.bf16.mxu0 0
    %1004 = vmatpush2.bf16.msra.mxu0 0
    %1005 = vmatprep.subr.bf16.mxu0 0
    %1006 = vmatpush2.bf16.msra.mxu0 0
    %1007 = vmatprep.mubr.bf16.mxu0 0
    %1008 = vmatmul.mubr.bf16.gmra.mxu0 %v973
    %v1009 = vpop.f32.mrf.mxu0
    %v1010 = vadd.f32 0.0, %v1009
    %v1011 = vpop.f32.mrf.mxu0
    %v1012 = vpop.f32.mrf.mxu0
    %v1013 = vpop.f32.mrf.mxu0
    %1014 = vdwg.mxu0
    %v1015 = vpack.c.bf16 %v1010, %v1010
    %v1017 = vsel %vm162, %v1015, 0
    %1019 = vmatprep.subr.bf16.mxu0 0
    %1020 = vmatpush1.bf16.msra.mxu0 0
    %1021 = vmatprep.subr.bf16.mxu0 0
    %1022 = vmatpush1.bf16.msra.mxu0 0
    %1023 = vmatprep.subr.bf16.mxu0 0
    %1024 = vmatpush1.bf16.msra.mxu0 0
    %1025 = vmatprep.subr.bf16.mxu0 0
    %1026 = vmatpush1.bf16.msra.mxu0 0
    %1027 = vmatprep.subr.bf16.mxu0 0
    %1028 = vmatpush1.bf16.msra.mxu0 0
    %1029 = vmatprep.subr.bf16.mxu0 0
    %1030 = vmatpush1.bf16.msra.mxu0 0
    %1031 = vmatprep.subr.bf16.mxu0 0
    %1032 = vmatpush1.bf16.msra.mxu0 %v383
    %1033 = vmatprep.subr.bf16.mxu0 0
    %1034 = vmatpush1.bf16.msra.mxu0 %v382
    %1035 = vmatprep.subr.bf16.mxu0 0
    %1036 = vmatpush2.bf16.msra.mxu0 0
    %1037 = vmatprep.subr.bf16.mxu0 0
    %1038 = vmatpush2.bf16.msra.mxu0 0
    %1039 = vmatprep.subr.bf16.mxu0 0
    %1040 = vmatpush2.bf16.msra.mxu0 0
    %1041 = vmatprep.subr.bf16.mxu0 0
    %1042 = vmatpush2.bf16.msra.mxu0 0
    %1043 = vmatprep.subr.bf16.mxu0 0
    %1044 = vmatpush2.bf16.msra.mxu0 0
    %1045 = vmatprep.subr.bf16.mxu0 0
    %1046 = vmatpush2.bf16.msra.mxu0 0
    %1047 = vmatprep.subr.bf16.mxu0 0
    %1048 = vmatpush2.bf16.msra.mxu0 0
    %1049 = vmatprep.subr.bf16.mxu0 0
    %1050 = vmatpush2.bf16.msra.mxu0 0
    %1051 = vmatprep.mubr.bf16.mxu0 0
    %1052 = vmatmul.mubr.bf16.gmra.mxu0 %v1017
    %v1053 = vpop.f32.mrf.mxu0
    %v1054 = vadd.f32 0.0, %v1053
    %v1055 = vpop.f32.mrf.mxu0
    %v1056 = vpop.f32.mrf.mxu0
    %v1057 = vpop.f32.mrf.mxu0
    %1058 = vdwg.mxu0
    %v1060 = vrot.slane %v1054, 6
    %v1062 = vadd.f32 %v213, %v1060
    %v1063 = vmax.f32 %v1062, 0.0
    %v1064 = vpack.c.bf16 %v1063, %v1063
    %v1066 = vrot.slane %v1064, 1
    %v1068 = vsel %vm162, %v1066, 0
    %1070 = vmatprep.subr.bf16.mxu0 0
    %1071 = vmatpush1.bf16.msra.mxu0 0
    %1072 = vmatprep.subr.bf16.mxu0 0
    %1073 = vmatpush1.bf16.msra.mxu0 0
    %1074 = vmatprep.subr.bf16.mxu0 0
    %1075 = vmatpush1.bf16.msra.mxu0 0
    %1076 = vmatprep.subr.bf16.mxu0 0
    %1077 = vmatpush1.bf16.msra.mxu0 0
    %1078 = vmatprep.subr.bf16.mxu0 0
    %1079 = vmatpush1.bf16.msra.mxu0 0
    %1080 = vmatprep.subr.bf16.mxu0 0
    %1081 = vmatpush1.bf16.msra.mxu0 0
    %1082 = vmatprep.subr.bf16.mxu0 0
    %1083 = vmatpush1.bf16.msra.mxu0 %v441
    %1084 = vmatprep.subr.bf16.mxu0 0
    %1085 = vmatpush1.bf16.msra.mxu0 %v440
    %1086 = vmatprep.subr.bf16.mxu0 0
    %1087 = vmatpush2.bf16.msra.mxu0 0
    %1088 = vmatprep.subr.bf16.mxu0 0
    %1089 = vmatpush2.bf16.msra.mxu0 0
    %1090 = vmatprep.subr.bf16.mxu0 0
    %1091 = vmatpush2.bf16.msra.mxu0 0
    %1092 = vmatprep.subr.bf16.mxu0 0
    %1093 = vmatpush2.bf16.msra.mxu0 0
    %1094 = vmatprep.subr.bf16.mxu0 0
    %1095 = vmatpush2.bf16.msra.mxu0 0
    %1096 = vmatprep.subr.bf16.mxu0 0
    %1097 = vmatpush2.bf16.msra.mxu0 0
    %1098 = vmatprep.subr.bf16.mxu0 0
    %1099 = vmatpush2.bf16.msra.mxu0 0
    %1100 = vmatprep.subr.bf16.mxu0 0
    %1101 = vmatpush2.bf16.msra.mxu0 0
    %1102 = vmatprep.mubr.bf16.mxu0 0
    %1103 = vmatmul.mubr.bf16.gmra.mxu0 %v1068
    %v1104 = vpop.f32.mrf.mxu0
    %v1105 = vadd.f32 %v227, %v1104
    %v1106 = vpop.f32.mrf.mxu0
    %v1107 = vpop.f32.mrf.mxu0
    %v1108 = vpop.f32.mrf.mxu0
    %1109 = vdwg.mxu0
    %v1110 = vadd.f32 %v1105, %v934
    %v1111 = vsub.f32 0.0, %v1110
    %v1112 = vmul.f32 %v1111, 1.442695
    %v1113 = vpow.pop %v1112
    %v1114 = vadd.f32 %v1113, 1.0
    %v1115 = vrcp.pop %v1114
    %v1116 = vmul.f32 1.0, %v1115
    %1117 = vrot.lane.b32.xlu0 %v934, 64
    %v1118 = vpop.permute.xlu0 %1117
    %v1120 = vmul.f32 %v1116, %v1118
    %1122 = vrot.lane.b32.xlu0 %v1120, 64
    %v1123 = vpop.permute.xlu0 %1122
    %v1125 = vadd.f32 %v1105, %v1123
    %v1126 = vtanh.pop %v1125
    %v1127 = vsub.f32 1.0, %v1116
    %1129 = vrot.lane.b32.xlu0 %v1126, 96
    %v1130 = vpop.permute.xlu0 %1129
    %v1132 = vmul.f32 %v1127, %v1130
    %v1133 = vmul.f32 %v1116, %v833
    %v1134 = vadd.f32 %v1132, %v1133
    %1136 = vrot.lane.b32.xlu0 %v1134, 96
    %v1137 = vpop.permute.xlu0 %1136
    %1139 = vst.msk [vmem:[#allocation17 + $0x2] sm:$0x1] %vm521, %v1137
    %v1140 = vpack.c.bf16 %v1134, %v1134
    %1142 = vrot.lane.b32.xlu0 %v1140, 96
    %v1143 = vpop.permute.xlu0 %1142
    %v1145 = vsel %vm162, %v1143, 0
    %1147 = vmatprep.subr.bf16.mxu0 0
    %1148 = vmatpush1.bf16.msra.mxu0 0
    %1149 = vmatprep.subr.bf16.mxu0 0
    %1150 = vmatpush1.bf16.msra.mxu0 0
    %1151 = vmatprep.subr.bf16.mxu0 0
    %1152 = vmatpush1.bf16.msra.mxu0 0
    %1153 = vmatprep.subr.bf16.mxu0 0
    %1154 = vmatpush1.bf16.msra.mxu0 0
    %1155 = vmatprep.subr.bf16.mxu0 0
    %1156 = vmatpush1.bf16.msra.mxu0 0
    %1157 = vmatprep.subr.bf16.mxu0 0
    %1158 = vmatpush1.bf16.msra.mxu0 0
    %1159 = vmatprep.subr.bf16.mxu0 0
    %1160 = vmatpush1.bf16.msra.mxu0 %v536
    %1161 = vmatprep.subr.bf16.mxu0 0
    %1162 = vmatpush1.bf16.msra.mxu0 %v535
    %1163 = vmatprep.subr.bf16.mxu0 0
    %1164 = vmatpush2.bf16.msra.mxu0 0
    %1165 = vmatprep.subr.bf16.mxu0 0
    %1166 = vmatpush2.bf16.msra.mxu0 0
    %1167 = vmatprep.subr.bf16.mxu0 0
    %1168 = vmatpush2.bf16.msra.mxu0 0
    %1169 = vmatprep.subr.bf16.mxu0 0
    %1170 = vmatpush2.bf16.msra.mxu0 0
    %1171 = vmatprep.subr.bf16.mxu0 0
    %1172 = vmatpush2.bf16.msra.mxu0 0
    %1173 = vmatprep.subr.bf16.mxu0 0
    %1174 = vmatpush2.bf16.msra.mxu0 0
    %1175 = vmatprep.subr.bf16.mxu0 0
    %1176 = vmatpush2.bf16.msra.mxu0 0
    %1177 = vmatprep.subr.bf16.mxu0 0
    %1178 = vmatpush2.bf16.msra.mxu0 0
    %1179 = vmatprep.mubr.bf16.mxu0 0
    %1180 = vmatmul.mubr.bf16.gmra.mxu0 %v1145
    %v1181 = vpop.f32.mrf.mxu0
    %v1182 = vadd.f32 %v233, %v1181
    %v1183 = vpop.f32.mrf.mxu0
    %v1184 = vpop.f32.mrf.mxu0
    %v1185 = vpop.f32.mrf.mxu0
    %1186 = vdwg.mxu0
    %v1187 = vsel %vm582, %v1182, -inf
    %1188 = vmax.xlane.f32.xlu0 %v1187
    %v1189 = vpop.xlane.xlu0 %1188
    %v1190 = vsub.f32 %v1182, %v1189
    %v1191 = vmul.f32 %v1190, 1.442695
    %v1192 = vpow.pop %v1191
    %v1193 = vsel %vm582, %v1192, 0.0
    %1194 = vadd.xlane.f32.xlu0 %v1193
    %v1195 = vpop.xlane.xlu0 %1194
    %v1196 = vlog2.pop %v1195
    %v1197 = vmul.f32 %v1196, 0.6931472
    %v1198 = vsub.f32 %v1190, %v1197
    %1199 = vst.msk [vmem:[#allocation16 + $0x2] sm:$0x1] %vm582, %v1198
    %1200 = vmatprep.subr.bf16.mxu0 0
    %1201 = vmatpush1.bf16.msra.mxu0 0
    %1202 = vmatprep.subr.bf16.mxu0 0
    %1203 = vmatpush1.bf16.msra.mxu0 0
    %1204 = vmatprep.subr.bf16.mxu0 0
    %1205 = vmatpush1.bf16.msra.mxu0 0
    %1206 = vmatprep.subr.bf16.mxu0 0
    %1207 = vmatpush1.bf16.msra.mxu0 0
    %1208 = vmatprep.subr.bf16.mxu0 0
    %1209 = vmatpush1.bf16.msra.mxu0 0
    %1210 = vmatprep.subr.bf16.mxu0 0
    %1211 = vmatpush1.bf16.msra.mxu0 0
    %1212 = vmatprep.subr.bf16.mxu0 0
    %1213 = vmatpush1.bf16.msra.mxu0 %v245
    %1214 = vmatprep.subr.bf16.mxu0 0
    %1215 = vmatpush1.bf16.msra.mxu0 %v244
    %1216 = vmatprep.subr.bf16.mxu0 0
    %1217 = vmatpush2.bf16.msra.mxu0 0
    %1218 = vmatprep.subr.bf16.mxu0 0
    %1219 = vmatpush2.bf16.msra.mxu0 0
    %1220 = vmatprep.subr.bf16.mxu0 0
    %1221 = vmatpush2.bf16.msra.mxu0 0
    %1222 = vmatprep.subr.bf16.mxu0 0
    %1223 = vmatpush2.bf16.msra.mxu0 0
    %1224 = vmatprep.subr.bf16.mxu0 0
    %1225 = vmatpush2.bf16.msra.mxu0 0
    %1226 = vmatprep.subr.bf16.mxu0 0
    %1227 = vmatpush2.bf16.msra.mxu0 0
    %1228 = vmatprep.subr.bf16.mxu0 0
    %1229 = vmatpush2.bf16.msra.mxu0 0
    %1230 = vmatprep.subr.bf16.mxu0 0
    %1231 = vmatpush2.bf16.msra.mxu0 0
    %1232 = vmatprep.mubr.bf16.mxu0 0
    %1233 = vmatmul.mubr.bf16.gmra.mxu0 %v1145
    %v1234 = vpop.f32.mrf.mxu0
    %v1235 = vadd.f32 %v228, %v1234
    %v1236 = vpop.f32.mrf.mxu0
    %v1237 = vpop.f32.mrf.mxu0
    %v1238 = vpop.f32.mrf.mxu0
    %1239 = vdwg.mxu0
    %v1241 = vrot.slane %v1235, 5
    %1242 = vrot.lane.b32.xlu0 %v1241, 64
    %v1243 = vpop.permute.xlu0 %1242
    %v1245 = vadd.f32 %v201, %v1243
    %vm1246 = vcmask 314627
    %v1247 = vsel %vm1246, %v1245, -inf
    %1248 = vmax.xlane.f32.xlu0 %v1247
    %v1249 = vpop.xlane.xlu0 %1248
    %v1250 = vsub.f32 %v1245, %v1249
    %v1251 = vmul.f32 %v1250, 1.442695
    %v1252 = vpow.pop %v1251
    %1254 = vrot.lane.b32.xlu0 %v1252, 96
    %v1255 = vpop.permute.xlu0 %1254
    %vm1257 = vcmask 52227
    %v1258 = vsel %vm1257, %v1255, 0.0
    %1259 = vadd.xlane.f32.xlu0 %v1258
    %v1260 = vpop.xlane.xlu0 %1259
    %v1261 = vrcp.pop %v1260
    %v1262 = vmul.f32 %v1252, %v1261
    %1264 = vrot.lane.b32.xlu0 %v1262, 96
    %v1265 = vpop.permute.xlu0 %1264
    %1267 = vst.msk [vmem:[#allocation19] sm:$0x8] %vm1257, %v1265
    %v1268 = vpack.c.bf16 %v1262, %v1262
    %v1270 = vshrl.u32 %v1268, 16
    %v1272 = vrot.slane %v1270, 1
    %1273 = vrot.lane.b32.xlu0 %v1272, 96
    %v1274 = vpop.permute.xlu0 %1273
    %v1276 = vsel %vm322, %v1274, 0
    %1278 = vmatprep.subr.bf16.mxu0 0
    %1279 = vmatpush1.bf16.msra.mxu0 0
    %1280 = vmatprep.subr.bf16.mxu0 0
    %1281 = vmatpush1.bf16.msra.mxu0 0
    %1282 = vmatprep.subr.bf16.mxu0 0
    %1283 = vmatpush1.bf16.msra.mxu0 0
    %1284 = vmatprep.subr.bf16.mxu0 0
    %1285 = vmatpush1.bf16.msra.mxu0 0
    %1286 = vmatprep.subr.bf16.mxu0 0
    %1287 = vmatpush1.bf16.msra.mxu0 0
    %1288 = vmatprep.subr.bf16.mxu0 0
    %1289 = vmatpush1.bf16.msra.mxu0 0
    %1290 = vmatprep.subr.bf16.mxu0 0
    %1291 = vmatpush1.bf16.msra.mxu0 0
    %1292 = vmatprep.subr.bf16.mxu0 0
    %1293 = vmatpush1.bf16.msra.mxu0 %v331
    %1294 = vmatprep.subr.bf16.mxu0 0
    %1295 = vmatpush2.bf16.msra.mxu0 0
    %1296 = vmatprep.subr.bf16.mxu0 0
    %1297 = vmatpush2.bf16.msra.mxu0 0
    %1298 = vmatprep.subr.bf16.mxu0 0
    %1299 = vmatpush2.bf16.msra.mxu0 0
    %1300 = vmatprep.subr.bf16.mxu0 0
    %1301 = vmatpush2.bf16.msra.mxu0 0
    %1302 = vmatprep.subr.bf16.mxu0 0
    %1303 = vmatpush2.bf16.msra.mxu0 0
    %1304 = vmatprep.subr.bf16.mxu0 0
    %1305 = vmatpush2.bf16.msra.mxu0 0
    %1306 = vmatprep.subr.bf16.mxu0 0
    %1307 = vmatpush2.bf16.msra.mxu0 0
    %1308 = vmatprep.subr.bf16.mxu0 0
    %1309 = vmatpush2.bf16.msra.mxu0 0
    %1310 = vmatprep.mubr.bf16.mxu0 0
    %1311 = vmatmul.mubr.bf16.gmra.mxu0 %v1276
    %v1312 = vpop.f32.mrf.mxu0
    %v1313 = vadd.f32 0.0, %v1312
    %v1314 = vpop.f32.mrf.mxu0
    %v1315 = vpop.f32.mrf.mxu0
    %v1316 = vpop.f32.mrf.mxu0
    %1317 = vdwg.mxu0
    %v1318 = vpack.c.bf16 %v1313, %v1313
    %v1320 = vsel %vm162, %v1318, 0
    %1322 = vmatprep.subr.bf16.mxu0 0
    %1323 = vmatpush1.bf16.msra.mxu0 0
    %1324 = vmatprep.subr.bf16.mxu0 0
    %1325 = vmatpush1.bf16.msra.mxu0 0
    %1326 = vmatprep.subr.bf16.mxu0 0
    %1327 = vmatpush1.bf16.msra.mxu0 0
    %1328 = vmatprep.subr.bf16.mxu0 0
    %1329 = vmatpush1.bf16.msra.mxu0 0
    %1330 = vmatprep.subr.bf16.mxu0 0
    %1331 = vmatpush1.bf16.msra.mxu0 0
    %1332 = vmatprep.subr.bf16.mxu0 0
    %1333 = vmatpush1.bf16.msra.mxu0 0
    %1334 = vmatprep.subr.bf16.mxu0 0
    %1335 = vmatpush1.bf16.msra.mxu0 %v383
    %1336 = vmatprep.subr.bf16.mxu0 0
    %1337 = vmatpush1.bf16.msra.mxu0 %v382
    %1338 = vmatprep.subr.bf16.mxu0 0
    %1339 = vmatpush2.bf16.msra.mxu0 0
    %1340 = vmatprep.subr.bf16.mxu0 0
    %1341 = vmatpush2.bf16.msra.mxu0 0
    %1342 = vmatprep.subr.bf16.mxu0 0
    %1343 = vmatpush2.bf16.msra.mxu0 0
    %1344 = vmatprep.subr.bf16.mxu0 0
    %1345 = vmatpush2.bf16.msra.mxu0 0
    %1346 = vmatprep.subr.bf16.mxu0 0
    %1347 = vmatpush2.bf16.msra.mxu0 0
    %1348 = vmatprep.subr.bf16.mxu0 0
    %1349 = vmatpush2.bf16.msra.mxu0 0
    %1350 = vmatprep.subr.bf16.mxu0 0
    %1351 = vmatpush2.bf16.msra.mxu0 0
    %1352 = vmatprep.subr.bf16.mxu0 0
    %1353 = vmatpush2.bf16.msra.mxu0 0
    %1354 = vmatprep.mubr.bf16.mxu0 0
    %1355 = vmatmul.mubr.bf16.gmra.mxu0 %v1320
    %v1356 = vpop.f32.mrf.mxu0
    %v1357 = vadd.f32 0.0, %v1356
    %v1358 = vpop.f32.mrf.mxu0
    %v1359 = vpop.f32.mrf.mxu0
    %v1360 = vpop.f32.mrf.mxu0
    %1361 = vdwg.mxu0
    %v1363 = vrot.slane %v1357, 5
    %v1365 = vadd.f32 %v213, %v1363
    %v1366 = vmax.f32 %v1365, 0.0
    %v1367 = vpack.c.bf16 %v1366, %v1366
    %v1369 = vshrl.u32 %v1367, 16
    %v1371 = vrot.slane %v1369, 1
    %v1373 = vsel %vm162, %v1371, 0
    %1375 = vmatprep.subr.bf16.mxu0 0
    %1376 = vmatpush1.bf16.msra.mxu0 0
    %1377 = vmatprep.subr.bf16.mxu0 0
    %1378 = vmatpush1.bf16.msra.mxu0 0
    %1379 = vmatprep.subr.bf16.mxu0 0
    %1380 = vmatpush1.bf16.msra.mxu0 0
    %1381 = vmatprep.subr.bf16.mxu0 0
    %1382 = vmatpush1.bf16.msra.mxu0 0
    %1383 = vmatprep.subr.bf16.mxu0 0
    %1384 = vmatpush1.bf16.msra.mxu0 0
    %1385 = vmatprep.subr.bf16.mxu0 0
    %1386 = vmatpush1.bf16.msra.mxu0 0
    %1387 = vmatprep.subr.bf16.mxu0 0
    %1388 = vmatpush1.bf16.msra.mxu0 %v441
    %1389 = vmatprep.subr.bf16.mxu0 0
    %1390 = vmatpush1.bf16.msra.mxu0 %v440
    %1391 = vmatprep.subr.bf16.mxu0 0
    %1392 = vmatpush2.bf16.msra.mxu0 0
    %1393 = vmatprep.subr.bf16.mxu0 0
    %1394 = vmatpush2.bf16.msra.mxu0 0
    %1395 = vmatprep.subr.bf16.mxu0 0
    %1396 = vmatpush2.bf16.msra.mxu0 0
    %1397 = vmatprep.subr.bf16.mxu0 0
    %1398 = vmatpush2.bf16.msra.mxu0 0
    %1399 = vmatprep.subr.bf16.mxu0 0
    %1400 = vmatpush2.bf16.msra.mxu0 0
    %1401 = vmatprep.subr.bf16.mxu0 0
    %1402 = vmatpush2.bf16.msra.mxu0 0
    %1403 = vmatprep.subr.bf16.mxu0 0
    %1404 = vmatpush2.bf16.msra.mxu0 0
    %1405 = vmatprep.subr.bf16.mxu0 0
    %1406 = vmatpush2.bf16.msra.mxu0 0
    %1407 = vmatprep.mubr.bf16.mxu0 0
    %1408 = vmatmul.mubr.bf16.gmra.mxu0 %v1373
    %v1409 = vpop.f32.mrf.mxu0
    %v1410 = vadd.f32 %v227, %v1409
    %v1411 = vpop.f32.mrf.mxu0
    %v1412 = vpop.f32.mrf.mxu0
    %v1413 = vpop.f32.mrf.mxu0
    %1414 = vdwg.mxu0
    %v1415 = vadd.f32 %v1410, %v1235
    %v1416 = vsub.f32 0.0, %v1415
    %v1417 = vmul.f32 %v1416, 1.442695
    %v1418 = vpow.pop %v1417
    %v1419 = vadd.f32 %v1418, 1.0
    %v1420 = vrcp.pop %v1419
    %v1421 = vmul.f32 1.0, %v1420
    %1422 = vrot.lane.b32.xlu0 %v1235, 64
    %v1423 = vpop.permute.xlu0 %1422
    %v1425 = vmul.f32 %v1421, %v1423
    %1427 = vrot.lane.b32.xlu0 %v1425, 64
    %v1428 = vpop.permute.xlu0 %1427
    %v1430 = vadd.f32 %v1410, %v1428
    %v1431 = vtanh.pop %v1430
    %v1432 = vsub.f32 1.0, %v1421
    %1434 = vrot.lane.b32.xlu0 %v1431, 96
    %v1435 = vpop.permute.xlu0 %1434
    %v1437 = vmul.f32 %v1432, %v1435
    %v1438 = vmul.f32 %v1421, %v1134
    %v1439 = vadd.f32 %v1437, %v1438
    %1441 = vrot.lane.b32.xlu0 %v1439, 96
    %v1442 = vpop.permute.xlu0 %1441
    %1444 = vst.msk [vmem:[#allocation17 + $0x3] sm:$0x1] %vm521, %v1442
    %v1445 = vpack.c.bf16 %v1439, %v1439
    %1447 = vrot.lane.b32.xlu0 %v1445, 96
    %v1448 = vpop.permute.xlu0 %1447
    %v1450 = vsel %vm162, %v1448, 0
    %1452 = vmatprep.subr.bf16.mxu0 0
    %1453 = vmatpush1.bf16.msra.mxu0 0
    %1454 = vmatprep.subr.bf16.mxu0 0
    %1455 = vmatpush1.bf16.msra.mxu0 0
    %1456 = vmatprep.subr.bf16.mxu0 0
    %1457 = vmatpush1.bf16.msra.mxu0 0
    %1458 = vmatprep.subr.bf16.mxu0 0
    %1459 = vmatpush1.bf16.msra.mxu0 0
    %1460 = vmatprep.subr.bf16.mxu0 0
    %1461 = vmatpush1.bf16.msra.mxu0 0
    %1462 = vmatprep.subr.bf16.mxu0 0
    %1463 = vmatpush1.bf16.msra.mxu0 0
    %1464 = vmatprep.subr.bf16.mxu0 0
    %1465 = vmatpush1.bf16.msra.mxu0 %v536
    %1466 = vmatprep.subr.bf16.mxu0 0
    %1467 = vmatpush1.bf16.msra.mxu0 %v535
    %1468 = vmatprep.subr.bf16.mxu0 0
    %1469 = vmatpush2.bf16.msra.mxu0 0
    %1470 = vmatprep.subr.bf16.mxu0 0
    %1471 = vmatpush2.bf16.msra.mxu0 0
    %1472 = vmatprep.subr.bf16.mxu0 0
    %1473 = vmatpush2.bf16.msra.mxu0 0
    %1474 = vmatprep.subr.bf16.mxu0 0
    %1475 = vmatpush2.bf16.msra.mxu0 0
    %1476 = vmatprep.subr.bf16.mxu0 0
    %1477 = vmatpush2.bf16.msra.mxu0 0
    %1478 = vmatprep.subr.bf16.mxu0 0
    %1479 = vmatpush2.bf16.msra.mxu0 0
    %1480 = vmatprep.subr.bf16.mxu0 0
    %1481 = vmatpush2.bf16.msra.mxu0 0
    %1482 = vmatprep.subr.bf16.mxu0 0
    %1483 = vmatpush2.bf16.msra.mxu0 0
    %1484 = vmatprep.mubr.bf16.mxu0 0
    %1485 = vmatmul.mubr.bf16.gmra.mxu0 %v1450
    %v1486 = vpop.f32.mrf.mxu0
    %v1487 = vadd.f32 %v233, %v1486
    %v1488 = vpop.f32.mrf.mxu0
    %v1489 = vpop.f32.mrf.mxu0
    %v1490 = vpop.f32.mrf.mxu0
    %1491 = vdwg.mxu0
    %v1492 = vsel %vm582, %v1487, -inf
    %1493 = vmax.xlane.f32.xlu0 %v1492
    %v1494 = vpop.xlane.xlu0 %1493
    %v1495 = vsub.f32 %v1487, %v1494
    %v1496 = vmul.f32 %v1495, 1.442695
    %v1497 = vpow.pop %v1496
    %v1498 = vsel %vm582, %v1497, 0.0
    %1499 = vadd.xlane.f32.xlu0 %v1498
    %v1500 = vpop.xlane.xlu0 %1499
    %v1501 = vlog2.pop %v1500
    %v1502 = vmul.f32 %v1501, 0.6931472
    %v1503 = vsub.f32 %v1495, %v1502
    %1504 = vst.msk [vmem:[#allocation16 + $0x3] sm:$0x1] %vm582, %v1503
    %1505 = vmatprep.subr.bf16.mxu0 0
    %1506 = vmatpush1.bf16.msra.mxu0 0
    %1507 = vmatprep.subr.bf16.mxu0 0
    %1508 = vmatpush1.bf16.msra.mxu0 0
    %1509 = vmatprep.subr.bf16.mxu0 0
    %1510 = vmatpush1.bf16.msra.mxu0 0
    %1511 = vmatprep.subr.bf16.mxu0 0
    %1512 = vmatpush1.bf16.msra.mxu0 0
    %1513 = vmatprep.subr.bf16.mxu0 0
    %1514 = vmatpush1.bf16.msra.mxu0 0
    %1515 = vmatprep.subr.bf16.mxu0 0
    %1516 = vmatpush1.bf16.msra.mxu0 0
    %1517 = vmatprep.subr.bf16.mxu0 0
    %1518 = vmatpush1.bf16.msra.mxu0 %v245
    %1519 = vmatprep.subr.bf16.mxu0 0
    %1520 = vmatpush1.bf16.msra.mxu0 %v244
    %1521 = vmatprep.subr.bf16.mxu0 0
    %1522 = vmatpush2.bf16.msra.mxu0 0
    %1523 = vmatprep.subr.bf16.mxu0 0
    %1524 = vmatpush2.bf16.msra.mxu0 0
    %1525 = vmatprep.subr.bf16.mxu0 0
    %1526 = vmatpush2.bf16.msra.mxu0 0
    %1527 = vmatprep.subr.bf16.mxu0 0
    %1528 = vmatpush2.bf16.msra.mxu0 0
    %1529 = vmatprep.subr.bf16.mxu0 0
    %1530 = vmatpush2.bf16.msra.mxu0 0
    %1531 = vmatprep.subr.bf16.mxu0 0
    %1532 = vmatpush2.bf16.msra.mxu0 0
    %1533 = vmatprep.subr.bf16.mxu0 0
    %1534 = vmatpush2.bf16.msra.mxu0 0
    %1535 = vmatprep.subr.bf16.mxu0 0
    %1536 = vmatpush2.bf16.msra.mxu0 0
    %1537 = vmatprep.mubr.bf16.mxu0 0
    %1538 = vmatmul.mubr.bf16.gmra.mxu0 %v1450
    %v1539 = vpop.f32.mrf.mxu0
    %v1540 = vadd.f32 %v228, %v1539
    %v1541 = vpop.f32.mrf.mxu0
    %v1542 = vpop.f32.mrf.mxu0
    %v1543 = vpop.f32.mrf.mxu0
    %1544 = vdwg.mxu0
    %v1546 = vrot.slane %v1540, 4
    %1547 = vrot.lane.b32.xlu0 %v1546, 64
    %v1548 = vpop.permute.xlu0 %1547
    %v1550 = vadd.f32 %v201, %v1548
    %vm1551 = vcmask 315652
    %v1552 = vsel %vm1551, %v1550, -inf
    %1553 = vmax.xlane.f32.xlu0 %v1552
    %v1554 = vpop.xlane.xlu0 %1553
    %v1555 = vsub.f32 %v1550, %v1554
    %v1556 = vmul.f32 %v1555, 1.442695
    %v1557 = vpow.pop %v1556
    %1559 = vrot.lane.b32.xlu0 %v1557, 96
    %v1560 = vpop.permute.xlu0 %1559
    %vm1562 = vcmask 53252
    %v1563 = vsel %vm1562, %v1560, 0.0
    %1564 = vadd.xlane.f32.xlu0 %v1563
    %v1565 = vpop.xlane.xlu0 %1564
    %v1566 = vrcp.pop %v1565
    %v1567 = vmul.f32 %v1557, %v1566
    %1569 = vrot.lane.b32.xlu0 %v1567, 96
    %v1570 = vpop.permute.xlu0 %1569
    %1572 = vst.msk [vmem:[#allocation19] sm:$0x10] %vm1562, %v1570
    %v1573 = vpack.c.bf16 %v1567, %v1567
    %v1575 = vrot.slane %v1573, 2
    %1576 = vrot.lane.b32.xlu0 %v1575, 96
    %v1577 = vpop.permute.xlu0 %1576
    %v1579 = vsel %vm322, %v1577, 0
    %1581 = vmatprep.subr.bf16.mxu0 0
    %1582 = vmatpush1.bf16.msra.mxu0 0
    %1583 = vmatprep.subr.bf16.mxu0 0
    %1584 = vmatpush1.bf16.msra.mxu0 0
    %1585 = vmatprep.subr.bf16.mxu0 0
    %1586 = vmatpush1.bf16.msra.mxu0 0
    %1587 = vmatprep.subr.bf16.mxu0 0
    %1588 = vmatpush1.bf16.msra.mxu0 0
    %1589 = vmatprep.subr.bf16.mxu0 0
    %1590 = vmatpush1.bf16.msra.mxu0 0
    %1591 = vmatprep.subr.bf16.mxu0 0
    %1592 = vmatpush1.bf16.msra.mxu0 0
    %1593 = vmatprep.subr.bf16.mxu0 0
    %1594 = vmatpush1.bf16.msra.mxu0 0
    %1595 = vmatprep.subr.bf16.mxu0 0
    %1596 = vmatpush1.bf16.msra.mxu0 %v331
    %1597 = vmatprep.subr.bf16.mxu0 0
    %1598 = vmatpush2.bf16.msra.mxu0 0
    %1599 = vmatprep.subr.bf16.mxu0 0
    %1600 = vmatpush2.bf16.msra.mxu0 0
    %1601 = vmatprep.subr.bf16.mxu0 0
    %1602 = vmatpush2.bf16.msra.mxu0 0
    %1603 = vmatprep.subr.bf16.mxu0 0
    %1604 = vmatpush2.bf16.msra.mxu0 0
    %1605 = vmatprep.subr.bf16.mxu0 0
    %1606 = vmatpush2.bf16.msra.mxu0 0
    %1607 = vmatprep.subr.bf16.mxu0 0
    %1608 = vmatpush2.bf16.msra.mxu0 0
    %1609 = vmatprep.subr.bf16.mxu0 0
    %1610 = vmatpush2.bf16.msra.mxu0 0
    %1611 = vmatprep.subr.bf16.mxu0 0
    %1612 = vmatpush2.bf16.msra.mxu0 0
    %1613 = vmatprep.mubr.bf16.mxu0 0
    %1614 = vmatmul.mubr.bf16.gmra.mxu0 %v1579
    %v1615 = vpop.f32.mrf.mxu0
    %v1616 = vadd.f32 0.0, %v1615
    %v1617 = vpop.f32.mrf.mxu0
    %v1618 = vpop.f32.mrf.mxu0
    %v1619 = vpop.f32.mrf.mxu0
    %1620 = vdwg.mxu0
    %v1621 = vpack.c.bf16 %v1616, %v1616
    %v1623 = vsel %vm162, %v1621, 0
    %1625 = vmatprep.subr.bf16.mxu0 0
    %1626 = vmatpush1.bf16.msra.mxu0 0
    %1627 = vmatprep.subr.bf16.mxu0 0
    %1628 = vmatpush1.bf16.msra.mxu0 0
    %1629 = vmatprep.subr.bf16.mxu0 0
    %1630 = vmatpush1.bf16.msra.mxu0 0
    %1631 = vmatprep.subr.bf16.mxu0 0
    %1632 = vmatpush1.bf16.msra.mxu0 0
    %1633 = vmatprep.subr.bf16.mxu0 0
    %1634 = vmatpush1.bf16.msra.mxu0 0
    %1635 = vmatprep.subr.bf16.mxu0 0
    %1636 = vmatpush1.bf16.msra.mxu0 0
    %1637 = vmatprep.subr.bf16.mxu0 0
    %1638 = vmatpush1.bf16.msra.mxu0 %v383
    %1639 = vmatprep.subr.bf16.mxu0 0
    %1640 = vmatpush1.bf16.msra.mxu0 %v382
    %1641 = vmatprep.subr.bf16.mxu0 0
    %1642 = vmatpush2.bf16.msra.mxu0 0
    %1643 = vmatprep.subr.bf16.mxu0 0
    %1644 = vmatpush2.bf16.msra.mxu0 0
    %1645 = vmatprep.subr.bf16.mxu0 0
    %1646 = vmatpush2.bf16.msra.mxu0 0
    %1647 = vmatprep.subr.bf16.mxu0 0
    %1648 = vmatpush2.bf16.msra.mxu0 0
    %1649 = vmatprep.subr.bf16.mxu0 0
    %1650 = vmatpush2.bf16.msra.mxu0 0
    %1651 = vmatprep.subr.bf16.mxu0 0
    %1652 = vmatpush2.bf16.msra.mxu0 0
    %1653 = vmatprep.subr.bf16.mxu0 0
    %1654 = vmatpush2.bf16.msra.mxu0 0
    %1655 = vmatprep.subr.bf16.mxu0 0
    %1656 = vmatpush2.bf16.msra.mxu0 0
    %1657 = vmatprep.mubr.bf16.mxu0 0
    %1658 = vmatmul.mubr.bf16.gmra.mxu0 %v1623
    %v1659 = vpop.f32.mrf.mxu0
    %v1660 = vadd.f32 0.0, %v1659
    %v1661 = vpop.f32.mrf.mxu0
    %v1662 = vpop.f32.mrf.mxu0
    %v1663 = vpop.f32.mrf.mxu0
    %1664 = vdwg.mxu0
    %v1666 = vrot.slane %v1660, 4
    %v1668 = vadd.f32 %v213, %v1666
    %v1669 = vmax.f32 %v1668, 0.0
    %v1670 = vpack.c.bf16 %v1669, %v1669
    %v1672 = vrot.slane %v1670, 2
    %v1674 = vsel %vm162, %v1672, 0
    %1676 = vmatprep.subr.bf16.mxu0 0
    %1677 = vmatpush1.bf16.msra.mxu0 0
    %1678 = vmatprep.subr.bf16.mxu0 0
    %1679 = vmatpush1.bf16.msra.mxu0 0
    %1680 = vmatprep.subr.bf16.mxu0 0
    %1681 = vmatpush1.bf16.msra.mxu0 0
    %1682 = vmatprep.subr.bf16.mxu0 0
    %1683 = vmatpush1.bf16.msra.mxu0 0
    %1684 = vmatprep.subr.bf16.mxu0 0
    %1685 = vmatpush1.bf16.msra.mxu0 0
    %1686 = vmatprep.subr.bf16.mxu0 0
    %1687 = vmatpush1.bf16.msra.mxu0 0
    %1688 = vmatprep.subr.bf16.mxu0 0
    %1689 = vmatpush1.bf16.msra.mxu0 %v441
    %1690 = vmatprep.subr.bf16.mxu0 0
    %1691 = vmatpush1.bf16.msra.mxu0 %v440
    %1692 = vmatprep.subr.bf16.mxu0 0
    %1693 = vmatpush2.bf16.msra.mxu0 0
    %1694 = vmatprep.subr.bf16.mxu0 0
    %1695 = vmatpush2.bf16.msra.mxu0 0
    %1696 = vmatprep.subr.bf16.mxu0 0
    %1697 = vmatpush2.bf16.msra.mxu0 0
    %1698 = vmatprep.subr.bf16.mxu0 0
    %1699 = vmatpush2.bf16.msra.mxu0 0
    %1700 = vmatprep.subr.bf16.mxu0 0
    %1701 = vmatpush2.bf16.msra.mxu0 0
    %1702 = vmatprep.subr.bf16.mxu0 0
    %1703 = vmatpush2.bf16.msra.mxu0 0
    %1704 = vmatprep.subr.bf16.mxu0 0
    %1705 = vmatpush2.bf16.msra.mxu0 0
    %1706 = vmatprep.subr.bf16.mxu0 0
    %1707 = vmatpush2.bf16.msra.mxu0 0
    %1708 = vmatprep.mubr.bf16.mxu0 0
    %1709 = vmatmul.mubr.bf16.gmra.mxu0 %v1674
    %v1710 = vpop.f32.mrf.mxu0
    %v1711 = vadd.f32 %v227, %v1710
    %v1712 = vpop.f32.mrf.mxu0
    %v1713 = vpop.f32.mrf.mxu0
    %v1714 = vpop.f32.mrf.mxu0
    %1715 = vdwg.mxu0
    %v1716 = vadd.f32 %v1711, %v1540
    %v1717 = vsub.f32 0.0, %v1716
    %v1718 = vmul.f32 %v1717, 1.442695
    %v1719 = vpow.pop %v1718
    %v1720 = vadd.f32 %v1719, 1.0
    %v1721 = vrcp.pop %v1720
    %v1722 = vmul.f32 1.0, %v1721
    %1723 = vrot.lane.b32.xlu0 %v1540, 64
    %v1724 = vpop.permute.xlu0 %1723
    %v1726 = vmul.f32 %v1722, %v1724
    %1728 = vrot.lane.b32.xlu0 %v1726, 64
    %v1729 = vpop.permute.xlu0 %1728
    %v1731 = vadd.f32 %v1711, %v1729
    %v1732 = vtanh.pop %v1731
    %v1733 = vsub.f32 1.0, %v1722
    %1735 = vrot.lane.b32.xlu0 %v1732, 96
    %v1736 = vpop.permute.xlu0 %1735
    %v1738 = vmul.f32 %v1733, %v1736
    %v1739 = vmul.f32 %v1722, %v1439
    %v1740 = vadd.f32 %v1738, %v1739
    %1742 = vrot.lane.b32.xlu0 %v1740, 96
    %v1743 = vpop.permute.xlu0 %1742
    %1745 = vst.msk [vmem:[#allocation17 + $0x4] sm:$0x1] %vm521, %v1743
    %v1746 = vpack.c.bf16 %v1740, %v1740
    %1748 = vrot.lane.b32.xlu0 %v1746, 96
    %v1749 = vpop.permute.xlu0 %1748
    %v1751 = vsel %vm162, %v1749, 0
    %1753 = vmatprep.subr.bf16.mxu0 0
    %1754 = vmatpush1.bf16.msra.mxu0 0
    %1755 = vmatprep.subr.bf16.mxu0 0
    %1756 = vmatpush1.bf16.msra.mxu0 0
    %1757 = vmatprep.subr.bf16.mxu0 0
    %1758 = vmatpush1.bf16.msra.mxu0 0
    %1759 = vmatprep.subr.bf16.mxu0 0
    %1760 = vmatpush1.bf16.msra.mxu0 0
    %1761 = vmatprep.subr.bf16.mxu0 0
    %1762 = vmatpush1.bf16.msra.mxu0 0
    %1763 = vmatprep.subr.bf16.mxu0 0
    %1764 = vmatpush1.bf16.msra.mxu0 0
    %1765 = vmatprep.subr.bf16.mxu0 0
    %1766 = vmatpush1.bf16.msra.mxu0 %v536
    %1767 = vmatprep.subr.bf16.mxu0 0
    %1768 = vmatpush1.bf16.msra.mxu0 %v535
    %1769 = vmatprep.subr.bf16.mxu0 0
    %1770 = vmatpush2.bf16.msra.mxu0 0
    %1771 = vmatprep.subr.bf16.mxu0 0
    %1772 = vmatpush2.bf16.msra.mxu0 0
    %1773 = vmatprep.subr.bf16.mxu0 0
    %1774 = vmatpush2.bf16.msra.mxu0 0
    %1775 = vmatprep.subr.bf16.mxu0 0
    %1776 = vmatpush2.bf16.msra.mxu0 0
    %1777 = vmatprep.subr.bf16.mxu0 0
    %1778 = vmatpush2.bf16.msra.mxu0 0
    %1779 = vmatprep.subr.bf16.mxu0 0
    %1780 = vmatpush2.bf16.msra.mxu0 0
    %1781 = vmatprep.subr.bf16.mxu0 0
    %1782 = vmatpush2.bf16.msra.mxu0 0
    %1783 = vmatprep.subr.bf16.mxu0 0
    %1784 = vmatpush2.bf16.msra.mxu0 0
    %1785 = vmatprep.mubr.bf16.mxu0 0
    %1786 = vmatmul.mubr.bf16.gmra.mxu0 %v1751
    %v1787 = vpop.f32.mrf.mxu0
    %v1788 = vadd.f32 %v233, %v1787
    %v1789 = vpop.f32.mrf.mxu0
    %v1790 = vpop.f32.mrf.mxu0
    %v1791 = vpop.f32.mrf.mxu0
    %1792 = vdwg.mxu0
    %v1793 = vsel %vm582, %v1788, -inf
    %1794 = vmax.xlane.f32.xlu0 %v1793
    %v1795 = vpop.xlane.xlu0 %1794
    %v1796 = vsub.f32 %v1788, %v1795
    %v1797 = vmul.f32 %v1796, 1.442695
    %v1798 = vpow.pop %v1797
    %v1799 = vsel %vm582, %v1798, 0.0
    %1800 = vadd.xlane.f32.xlu0 %v1799
    %v1801 = vpop.xlane.xlu0 %1800
    %v1802 = vlog2.pop %v1801
    %v1803 = vmul.f32 %v1802, 0.6931472
    %v1804 = vsub.f32 %v1796, %v1803
    %1805 = vst.msk [vmem:[#allocation16 + $0x4] sm:$0x1] %vm582, %v1804
    // Predicated region
    $region82: #{tpu_custom_call.1} parent=1 // pred_check
      _
    $region83: #{tpu_custom_call.1} parent=1 // pred_check_branch
      %1807 = sbr.rel (0) target = $region85
    $region84: #{tpu_custom_call.1} parent=1 // pred_region
      %s1809 = ssub.s32 128, 128
      %1810 = vsyncadd [#allocation4], %s1809
      %s1812 = sshll.u32 [#allocation16], 4
      %s1813 = int_to_ptr.vmem [resolvable:$true] %s1812
      %1815 = dma.vmem_to_hbm [thread:$0]  %s1813, 128, %s12, [#allocation4]
    $region85: #{tpu_custom_call.1} parent=1 // pred_fallthru
      _
    // Predicated region
    $region86: #{tpu_custom_call.1} parent=1 // pred_check
      _
    $region87: #{tpu_custom_call.1} parent=1 // pred_check_branch
      %1817 = sbr.rel (0) target = $region89
    $region88: #{tpu_custom_call.1} parent=1 // pred_region
      %s1819 = ssub.s32 128, 128
      %1820 = vsyncadd [#allocation18], %s1819
      %s1822 = sshll.u32 [#allocation17], 4
      %s1823 = int_to_ptr.vmem [resolvable:$true] %s1822
      %1825 = dma.vmem_to_hbm [thread:$0]  %s1823, 128, %s13, [#allocation18]
    $region89: #{tpu_custom_call.1} parent=1 // pred_fallthru
      _
    // Predicated region
    $region90: #{tpu_custom_call.1} parent=1 // pred_check
      _
    $region91: #{tpu_custom_call.1} parent=1 // pred_check_branch
      %1827 = sbr.rel (0) target = $region93
    $region92: #{tpu_custom_call.1} parent=1 // pred_region
      %s1829 = ssub.s32 128, 128
      %1830 = vsyncadd [#allocation18], %s1829
      %s1832 = sshll.u32 [#allocation19], 4
      %s1833 = int_to_ptr.vmem [resolvable:$true] %s1832
      %1835 = dma.vmem_to_hbm [thread:$0]  %s1833, 128, %s14, [#allocation18]
    $region93: #{tpu_custom_call.1} parent=1 // pred_fallthru
      _
    // Predicated region
    $region94: #{tpu_custom_call.1} parent=1 // pred_check
      _
    $region95: #{tpu_custom_call.1} parent=1 // pred_check_branch
      %1837 = sbr.rel (0) target = $region97
    $region96: #{tpu_custom_call.1} parent=1 // pred_region
      %1838 = dma.done [#allocation4], 128
    $region97: #{tpu_custom_call.1} parent=1 // pred_fallthru
      _
    // Predicated region
    $region98: #{tpu_custom_call.1} parent=1 // pred_check
      _
    $region99: #{tpu_custom_call.1} parent=1 // pred_check_branch
      %1840 = sbr.rel (0) target = $region101
    $region100: #{tpu_custom_call.1} parent=1 // pred_region
      %1841 = dma.done [#allocation18], 128
    $region101: #{tpu_custom_call.1} parent=1 // pred_fallthru
      _
    // Predicated region
    $region102: #{tpu_custom_call.1} parent=1 // pred_check
      _
    $region103: #{tpu_custom_call.1} parent=1 // pred_check_branch
      %1843 = sbr.rel (0) target = $region105
    $region104: #{tpu_custom_call.1} parent=1 // pred_region
      %1844 = dma.done [#allocation18], 128
    $region105: #{tpu_custom_call.1} parent=1 // pred_fallthru
      _
    %1845 = vsyncpa [#allocation3], 1
    %1846 = vsyncpa [#allocation6], 1
    %1847 = vsyncpa [#allocation9], 1
    %1848 = vsyncpa [#allocation12], 1
    %1849 = vsyncpa [#allocation15], 1
    %1850 = vsyncpa [#allocation4], 1
    %1851 = vsyncpa [#allocation18], 1

</llo_original>
